<compile_context>
chip_gen: v7x
topology: tpu7x:2x2x1
jax: 0.10.0
libtpu: 0.0.40
codegen_flags: <defaults>
</compile_context>

<pallas_src>
import numpy as np
import jax
import jax.numpy as jnp
from jax.experimental import pallas as pl
from jax.experimental.pallas import tpu as pltpu

# ---------------- config (small shapes consistent with the module) ----------------
N_NODES        = 16
N_FEATURES     = 8
GNN_FWD_HIDDEN = [16, 16]        # gnns_forward_hidden  (gnn_forward_layer_num = 2)
GNN_REV_HIDDEN = [16, 16]        # gnns_reverse_hidden  (gnn_reverse_layer_num = 2)
LINEAR_LAYERS  = 2               # linear_layer_num
LIN_HIDDEN     = [16]            # linears_hidden
N_CLASSES      = 2
BN_EPS         = 1e-5
NEG_SLOPE      = 0.2             # GATConv leaky_relu default
SLAB_W         = 32              # packed-parameter slab width (>= widest param)

DIMS_F = [N_FEATURES] + GNN_FWD_HIDDEN
DIMS_R = [N_FEATURES] + GNN_REV_HIDDEN

VMEM = pl.BlockSpec(memory_space=pltpu.MemorySpace.VMEM)


# =============================== parameter packing ===============================

def _glorot(key, shape):
    lim = (6.0 / (shape[0] + shape[1])) ** 0.5
    return jax.random.uniform(key, shape, jnp.float32, -lim, lim)


def build_packed_params(key):
    """Init weights, fold eval-BN into them, fuse the attention vectors into the GAT
    projection matrices, and pack everything into one (rows, SLAB_W) f32 slab.

    Returns (slab_jnp, offsets) where offsets[name] = (row_offset, rows, cols)."""
    keys = iter(jax.random.split(key, 64))
    bn_scale = 1.0 / np.sqrt(1.0 + BN_EPS)   # eval BN: gamma=1, beta=0, mean=0, var=1

    entries = []                              # (name, 2-D np array)

    def add(name, arr):
        arr = np.asarray(arr, np.float32)
        assert arr.ndim == 2 and arr.shape[1] <= SLAB_W
        entries.append((name, arr))

    def gat_stack(prefix, dims):
        for i in range(len(dims) - 1):
            fi, fo = dims[i], dims[i + 1]
            w     = np.asarray(_glorot(next(keys), (fi, fo)), np.float32)
            a_src = np.asarray(_glorot(next(keys), (1, fo)), np.float32)
            a_dst = np.asarray(_glorot(next(keys), (1, fo)), np.float32)
            b     = np.zeros((1, fo), np.float32)
            # fused + BN-folded projection:
            #   cols [0:fo]   -> h @ (w * bn_scale)        (linear part, BN folded in)
            #   col  [fo]     -> h @ (w @ a_dst.T)         (dst attention score, unfolded)
            #   col  [fo+1]   -> h @ (w @ a_src.T)         (src attention score, unfolded)
            w_ext = np.concatenate([w * bn_scale, w @ a_dst.T, w @ a_src.T], axis=1)
            add(f"{prefix}{i}_wext", w_ext)
            add(f"{prefix}{i}_b", b * bn_scale)            # + bn_shift (= 0)

    def fc_block(prefix, in_dim):
        dims = [in_dim] + LIN_HIDDEN
        for i in range(LINEAR_LAYERS - 1):                 # Linear + eval-BN + ReLU
            w = np.asarray(_glorot(next(keys), (dims[i], dims[i + 1])), np.float32)
            add(f"{prefix}_h{i}_w", w * bn_scale)
            add(f"{prefix}_h{i}_b", np.zeros((1, dims[i + 1]), np.float32))
        w = np.asarray(_glorot(next(keys), (dims[-1], N_CLASSES)), np.float32)
        add(f"{prefix}_out_w", w)                          # final Linear (no BN)
        add(f"{prefix}_out_b", np.zeros((1, N_CLASSES), np.float32))

    gat_stack("dgat", DIMS_F)
    gat_stack("rdgat", DIMS_R)
    fc_block("fc1", DIMS_F[-1] + DIMS_R[-1])
    fc_block("fc2", DIMS_F[-1])

    # pack, each entry aligned to 8 sublanes
    offsets, row = {}, 0
    for name, arr in entries:
        offsets[name] = (row, arr.shape[0], arr.shape[1])
        row += ((arr.shape[0] + 7) // 8) * 8
    slab = np.zeros((max(8, ((row + 7) // 8) * 8), SLAB_W), np.float32)
    for name, arr in entries:
        off, r, c = offsets[name]
        slab[off:off + r, :c] = arr
    return jnp.asarray(slab), offsets


# =============================== fused forward kernel ===============================

def build_forward(offsets, batch):
    """Return a callable (slab, x, adj, sel, m) -> (B, C) logits: one grid-less pallas_call."""
    n_gat = len(DIMS_F) - 1
    B = batch

    def kernel(slab_ref, x_ref, adj_ref, sel_ref, m_ref, out_ref):
        P   = slab_ref[...]
        x   = x_ref[...]
        adj = adj_ref[...]
        sel = sel_ref[...]
        m   = m_ref[...]
        N   = adj.shape[0]

        def get(name):
            off, r, c = offsets[name]
            return P[off:off + r, :c]

        # same adjacency for both directions -> one mask, stacked on the sublane axis
        edge2 = jnp.concatenate([adj, adj], axis=0) > 0               # (2N, N)

        hf = x
        hr = x
        for l in range(n_gat):
            Ff, Fr = DIMS_F[l + 1], DIMS_R[l + 1]
            hwf = jnp.dot(hf, get(f"dgat{l}_wext"),
                          preferred_element_type=jnp.float32)         # (N, Ff+2)
            hwr = jnp.dot(hr, get(f"rdgat{l}_wext"),
                          preferred_element_type=jnp.float32)         # (N, Fr+2)
            # e[i, j] = a_dst[i] + a_src[j]; both directions stacked -> (2N, N)
            e = jnp.concatenate(
                [hwf[:, Ff:Ff + 1] + hwf[:, Ff + 1:Ff + 2].T,
                 hwr[:, Fr:Fr + 1] + hwr[:, Fr + 1:Fr + 2].T], axis=0)
            e = jnp.where(e > 0, e, NEG_SLOPE * e)                    # LeakyReLU(0.2)
            e = jnp.where(edge2, e, -1e30)                            # mask non-edges
            e = e - jnp.max(e, axis=-1, keepdims=True)
            p = jnp.where(edge2, jnp.exp(e), 0.0)
            # self-loops guarantee >=1 edge per row, so the row sum is never zero
            attn = p * pl.reciprocal(jnp.sum(p, axis=-1, keepdims=True), approx=True)
            hf = jnp.maximum(
                jnp.dot(attn[:N], hwf[:, :Ff], preferred_element_type=jnp.float32)
                + get(f"dgat{l}_b"), 0.0)                             # +bias, BN folded, ReLU
            hr = jnp.maximum(
                jnp.dot(attn[N:], hwr[:, :Fr], preferred_element_type=jnp.float32)
                + get(f"rdgat{l}_b"), 0.0)

        # masked node gather (DGh[-1][mask], RDGh[-1][mask]) as one-hot matmuls
        dgh  = jnp.dot(sel, hf, preferred_element_type=jnp.float32)   # (B, Ff)
        rdgh = jnp.dot(sel, hr, preferred_element_type=jnp.float32)   # (B, Fr)

        def fc(prefix, h):
            for i in range(LINEAR_LAYERS - 1):
                h = jnp.dot(h, get(f"{prefix}_h{i}_w"),
                            preferred_element_type=jnp.float32) + get(f"{prefix}_h{i}_b")
                h = jnp.maximum(h, 0.0)                               # BN folded, ReLU
            return jnp.dot(h, get(f"{prefix}_out_w"),
                           preferred_element_type=jnp.float32) + get(f"{prefix}_out_b")

        h1 = fc("fc1", jnp.concatenate([dgh, rdgh], axis=-1))         # (B, C)
        h2 = fc("fc2", jnp.concatenate([dgh, rdgh], axis=0))          # (2B, C), shared weights
        out_ref[...] = m[:, 0:1] * h1 + m[:, 1:2] * h2[:B] + m[:, 2:3] * h2[B:]

    def forward(slab, x, adj, sel, masks):
        return pl.pallas_call(
            kernel,
            out_shape=jax.ShapeDtypeStruct((B, N_CLASSES), jnp.float32),
            in_specs=[VMEM] * 5,
            out_specs=VMEM,
        )(slab, x, adj, sel, masks)

    return forward


# =============================== main ===============================

if __name__ == "__main__":
    key = jax.random.PRNGKey(0)
    k_x, k_p = jax.random.split(key)

    # node features
    x = jax.random.normal(k_x, (N_NODES, N_FEATURES), jnp.float32)

    # edge_index: directed chain 0->1->...->15 plus a few extra directed edges
    src = np.concatenate([np.arange(N_NODES - 1), np.array([3, 7, 11])])
    dst = np.concatenate([np.arange(1, N_NODES), np.array([5, 2, 9])])
    edge_index = np.stack([src, dst], axis=0).astype(np.int32)

    # dense adjacency adj[i, j] = 1 iff edge j -> i, plus self loops (GATConv default).
    # The module passes the SAME edge_index to DGat and RDGat, so one adjacency serves both.
    adj_np = np.zeros((N_NODES, N_NODES), np.float32)
    adj_np[edge_index[1], edge_index[0]] = 1.0
    adj_np[np.arange(N_NODES), np.arange(N_NODES)] = 1.0
    adj = jnp.asarray(adj_np)

    # boolean node mask -> one-hot selection matrix (gather done in-kernel as a matmul)
    mask = np.zeros(N_NODES, bool)
    mask[::2] = True
    mask_idx = np.nonzero(mask)[0]
    B = mask_idx.size
    sel_np = np.zeros((B, N_NODES), np.float32)
    sel_np[np.arange(B), mask_idx] = 1.0
    sel = jnp.asarray(sel_np)

    # TODO(synk): mask_h_vector / norm_adj / edgeIndex2CooAdj are not provided with the spec;
    # approximate them with a degree-based node partition computed on the host:
    #   col 0: nodes with both in- and out-edges, col 1: in-only, col 2: out-only.
    out_deg = np.zeros(N_NODES, np.float32)
    in_deg = np.zeros(N_NODES, np.float32)
    np.add.at(out_deg, edge_index[0], 1.0)
    np.add.at(in_deg, edge_index[1], 1.0)
    m_full = np.stack([((out_deg > 0) & (in_deg > 0)),
                       ((in_deg > 0) & (out_deg == 0)),
                       ((out_deg > 0) & (in_deg == 0))], axis=1).astype(np.float32)
    masks = jnp.asarray(m_full[mask_idx])                  # (B, 3)

    slab, offsets = build_packed_params(k_p)

    forward = jax.jit(build_forward(offsets, B))
    out = forward(slab, x, adj, sel, masks)
    out = jax.block_until_ready(out)

    assert out.shape == (B, N_CLASSES) and out.dtype == jnp.float32
    assert bool(jnp.all(jnp.isfinite(out)))
    print("KERNEL_OK")
</pallas_src>

<mosaic_0001>
module attributes {stable_mosaic.version = 11 : i64} {
  func.func @kernel(%arg0: memref<192x32xf32, #tpu.memory_space<vmem>>, %arg1: memref<16x8xf32, #tpu.memory_space<vmem>>, %arg2: memref<16x16xf32, #tpu.memory_space<vmem>>, %arg3: memref<8x16xf32, #tpu.memory_space<vmem>>, %arg4: memref<8x3xf32, #tpu.memory_space<vmem>>, %arg5: memref<8x2xf32, #tpu.memory_space<vmem>>) attributes {dimension_semantics = [], scalar_prefetch = 0 : i64, scratch_operands = 0 : i64, tpu.core_type = #tpu.core_type<tc>} {
    %c0 = arith.constant 0 : index
    %c0_0 = arith.constant 0 : index
    %0 = vector.load %arg0[%c0, %c0_0] : memref<192x32xf32, #tpu.memory_space<vmem>>, vector<192x32xf32>
    %c0_1 = arith.constant 0 : index
    %c0_2 = arith.constant 0 : index
    %1 = vector.load %arg1[%c0_1, %c0_2] : memref<16x8xf32, #tpu.memory_space<vmem>>, vector<16x8xf32>
    %c0_3 = arith.constant 0 : index
    %c0_4 = arith.constant 0 : index
    %2 = vector.load %arg2[%c0_3, %c0_4] : memref<16x16xf32, #tpu.memory_space<vmem>>, vector<16x16xf32>
    %c0_5 = arith.constant 0 : index
    %c0_6 = arith.constant 0 : index
    %3 = vector.load %arg3[%c0_5, %c0_6] : memref<8x16xf32, #tpu.memory_space<vmem>>, vector<8x16xf32>
    %c0_7 = arith.constant 0 : index
    %c0_8 = arith.constant 0 : index
    %4 = vector.load %arg4[%c0_7, %c0_8] : memref<8x3xf32, #tpu.memory_space<vmem>>, vector<8x3xf32>
    %5 = tpu.concatenate %2, %2 in 0 : vector<16x16xf32>, vector<16x16xf32> -> vector<32x16xf32>
    %cst = arith.constant 0.000000e+00 : f32
    %6 = vector.broadcast %cst : f32 to vector<32x16xf32>
    %7 = arith.cmpf ogt, %5, %6 : vector<32x16xf32>
    %8 = vector.extract_strided_slice %0 {offsets = [0, 0], sizes = [8, 18], strides = [1, 1]} : vector<192x32xf32> to vector<8x18xf32>
    %cst_9 = arith.constant dense<0.000000e+00> : vector<16x18xf32>
    %9 = tpu.matmul %1, %8, %cst_9 {dimension_numbers = #tpu.dot_dimension_numbers<[1], [0], [0], [1], [0, 0, 1, 1], [], []>} : vector<16x8xf32>, vector<8x18xf32>, vector<16x18xf32> -> vector<16x18xf32>
    %10 = vector.extract_strided_slice %0 {offsets = [40, 0], sizes = [8, 18], strides = [1, 1]} : vector<192x32xf32> to vector<8x18xf32>
    %cst_10 = arith.constant dense<0.000000e+00> : vector<16x18xf32>
    %11 = tpu.matmul %1, %10, %cst_10 {dimension_numbers = #tpu.dot_dimension_numbers<[1], [0], [0], [1], [0, 0, 1, 1], [], []>} : vector<16x8xf32>, vector<8x18xf32>, vector<16x18xf32> -> vector<16x18xf32>
    %12 = vector.extract_strided_slice %9 {offsets = [0, 16], sizes = [16, 1], strides = [1, 1]} : vector<16x18xf32> to vector<16x1xf32>
    %13 = vector.extract_strided_slice %9 {offsets = [0, 17], sizes = [16, 1], strides = [1, 1]} : vector<16x18xf32> to vector<16x1xf32>
    %14 = tpu.transpose %13, [1, 0] : vector<16x1xf32> -> vector<1x16xf32>
    %15 = vector.broadcast %12 : vector<16x1xf32> to vector<16x16xf32>
    %16 = vector.broadcast %14 : vector<1x16xf32> to vector<16x16xf32>
    %17 = arith.addf %15, %16 : vector<16x16xf32>
    %18 = vector.extract_strided_slice %11 {offsets = [0, 16], sizes = [16, 1], strides = [1, 1]} : vector<16x18xf32> to vector<16x1xf32>
    %19 = vector.extract_strided_slice %11 {offsets = [0, 17], sizes = [16, 1], strides = [1, 1]} : vector<16x18xf32> to vector<16x1xf32>
    %20 = tpu.transpose %19, [1, 0] : vector<16x1xf32> -> vector<1x16xf32>
    %21 = vector.broadcast %18 : vector<16x1xf32> to vector<16x16xf32>
    %22 = vector.broadcast %20 : vector<1x16xf32> to vector<16x16xf32>
    %23 = arith.addf %21, %22 : vector<16x16xf32>
    %24 = tpu.concatenate %17, %23 in 0 : vector<16x16xf32>, vector<16x16xf32> -> vector<32x16xf32>
    %cst_11 = arith.constant 0.000000e+00 : f32
    %25 = vector.broadcast %cst_11 : f32 to vector<32x16xf32>
    %26 = arith.cmpf ogt, %24, %25 : vector<32x16xf32>
    %cst_12 = arith.constant 2.000000e-01 : f32
    %27 = vector.broadcast %cst_12 : f32 to vector<32x16xf32>
    %28 = arith.mulf %27, %24 : vector<32x16xf32>
    %29 = arith.select %26, %24, %28 : vector<32x16xi1>, vector<32x16xf32>
    %cst_13 = arith.constant -1.000000e+30 : f32
    %30 = vector.broadcast %cst_13 : f32 to vector<32x16xf32>
    %31 = arith.select %7, %29, %30 : vector<32x16xi1>, vector<32x16xf32>
    %cst_14 = arith.constant dense<0xFF800000> : vector<32xf32>
    %32 = vector.multi_reduction <maximumf>, %31, %cst_14 [1] : vector<32x16xf32> to vector<32xf32>
    %33 = vector.shape_cast %32 : vector<32xf32> to vector<32x1xf32>
    %34 = vector.broadcast %33 : vector<32x1xf32> to vector<32x16xf32>
    %35 = arith.subf %31, %34 : vector<32x16xf32>
    %36 = math.exp %35 : vector<32x16xf32>
    %cst_15 = arith.constant 0.000000e+00 : f32
    %37 = vector.broadcast %cst_15 : f32 to vector<32x16xf32>
    %38 = arith.select %7, %36, %37 : vector<32x16xi1>, vector<32x16xf32>
    %cst_16 = arith.constant dense<0.000000e+00> : vector<32xf32>
    %39 = vector.multi_reduction <add>, %38, %cst_16 [1] : vector<32x16xf32> to vector<32xf32>
    %40 = vector.shape_cast %39 : vector<32xf32> to vector<32x1xf32>
    %41 = tpu.reciprocal %40 {approx = true} : vector<32x1xf32> -> vector<32x1xf32>
    %42 = vector.broadcast %41 : vector<32x1xf32> to vector<32x16xf32>
    %43 = arith.mulf %38, %42 : vector<32x16xf32>
    %44 = vector.extract_strided_slice %43 {offsets = [0, 0], sizes = [16, 16], strides = [1, 1]} : vector<32x16xf32> to vector<16x16xf32>
    %45 = vector.extract_strided_slice %9 {offsets = [0, 0], sizes = [16, 16], strides = [1, 1]} : vector<16x18xf32> to vector<16x16xf32>
    %cst_17 = arith.constant dense<0.000000e+00> : vector<16x16xf32>
    %46 = tpu.matmul %44, %45, %cst_17 {dimension_numbers = #tpu.dot_dimension_numbers<[1], [0], [0], [1], [0, 0, 1, 1], [], []>} : vector<16x16xf32>, vector<16x16xf32>, vector<16x16xf32> -> vector<16x16xf32>
    %47 = vector.extract_strided_slice %0 {offsets = [8, 0], sizes = [1, 16], strides = [1, 1]} : vector<192x32xf32> to vector<1x16xf32>
    %48 = vector.broadcast %47 : vector<1x16xf32> to vector<16x16xf32>
    %49 = arith.addf %46, %48 : vector<16x16xf32>
    %cst_18 = arith.constant 0.000000e+00 : f32
    %50 = vector.broadcast %cst_18 : f32 to vector<16x16xf32>
    %51 = arith.maximumf %49, %50 : vector<16x16xf32>
    %52 = vector.extract_strided_slice %43 {offsets = [16, 0], sizes = [16, 16], strides = [1, 1]} : vector<32x16xf32> to vector<16x16xf32>
    %53 = vector.extract_strided_slice %11 {offsets = [0, 0], sizes = [16, 16], strides = [1, 1]} : vector<16x18xf32> to vector<16x16xf32>
    %cst_19 = arith.constant dense<0.000000e+00> : vector<16x16xf32>
    %54 = tpu.matmul %52, %53, %cst_19 {dimension_numbers = #tpu.dot_dimension_numbers<[1], [0], [0], [1], [0, 0, 1, 1], [], []>} : vector<16x16xf32>, vector<16x16xf32>, vector<16x16xf32> -> vector<16x16xf32>
    %55 = vector.extract_strided_slice %0 {offsets = [48, 0], sizes = [1, 16], strides = [1, 1]} : vector<192x32xf32> to vector<1x16xf32>
    %56 = vector.broadcast %55 : vector<1x16xf32> to vector<16x16xf32>
    %57 = arith.addf %54, %56 : vector<16x16xf32>
    %cst_20 = arith.constant 0.000000e+00 : f32
    %58 = vector.broadcast %cst_20 : f32 to vector<16x16xf32>
    %59 = arith.maximumf %57, %58 : vector<16x16xf32>
    %60 = vector.extract_strided_slice %0 {offsets = [16, 0], sizes = [16, 18], strides = [1, 1]} : vector<192x32xf32> to vector<16x18xf32>
    %cst_21 = arith.constant dense<0.000000e+00> : vector<16x18xf32>
    %61 = tpu.matmul %51, %60, %cst_21 {dimension_numbers = #tpu.dot_dimension_numbers<[1], [0], [0], [1], [0, 0, 1, 1], [], []>} : vector<16x16xf32>, vector<16x18xf32>, vector<16x18xf32> -> vector<16x18xf32>
    %62 = vector.extract_strided_slice %0 {offsets = [56, 0], sizes = [16, 18], strides = [1, 1]} : vector<192x32xf32> to vector<16x18xf32>
    %cst_22 = arith.constant dense<0.000000e+00> : vector<16x18xf32>
    %63 = tpu.matmul %59, %62, %cst_22 {dimension_numbers = #tpu.dot_dimension_numbers<[1], [0], [0], [1], [0, 0, 1, 1], [], []>} : vector<16x16xf32>, vector<16x18xf32>, vector<16x18xf32> -> vector<16x18xf32>
    %64 = vector.extract_strided_slice %61 {offsets = [0, 16], sizes = [16, 1], strides = [1, 1]} : vector<16x18xf32> to vector<16x1xf32>
    %65 = vector.extract_strided_slice %61 {offsets = [0, 17], sizes = [16, 1], strides = [1, 1]} : vector<16x18xf32> to vector<16x1xf32>
    %66 = tpu.transpose %65, [1, 0] : vector<16x1xf32> -> vector<1x16xf32>
    %67 = vector.broadcast %64 : vector<16x1xf32> to vector<16x16xf32>
    %68 = vector.broadcast %66 : vector<1x16xf32> to vector<16x16xf32>
    %69 = arith.addf %67, %68 : vector<16x16xf32>
    %70 = vector.extract_strided_slice %63 {offsets = [0, 16], sizes = [16, 1], strides = [1, 1]} : vector<16x18xf32> to vector<16x1xf32>
    %71 = vector.extract_strided_slice %63 {offsets = [0, 17], sizes = [16, 1], strides = [1, 1]} : vector<16x18xf32> to vector<16x1xf32>
    %72 = tpu.transpose %71, [1, 0] : vector<16x1xf32> -> vector<1x16xf32>
    %73 = vector.broadcast %70 : vector<16x1xf32> to vector<16x16xf32>
    %74 = vector.broadcast %72 : vector<1x16xf32> to vector<16x16xf32>
    %75 = arith.addf %73, %74 : vector<16x16xf32>
    %76 = tpu.concatenate %69, %75 in 0 : vector<16x16xf32>, vector<16x16xf32> -> vector<32x16xf32>
    %cst_23 = arith.constant 0.000000e+00 : f32
    %77 = vector.broadcast %cst_23 : f32 to vector<32x16xf32>
    %78 = arith.cmpf ogt, %76, %77 : vector<32x16xf32>
    %cst_24 = arith.constant 2.000000e-01 : f32
    %79 = vector.broadcast %cst_24 : f32 to vector<32x16xf32>
    %80 = arith.mulf %79, %76 : vector<32x16xf32>
    %81 = arith.select %78, %76, %80 : vector<32x16xi1>, vector<32x16xf32>
    %cst_25 = arith.constant -1.000000e+30 : f32
    %82 = vector.broadcast %cst_25 : f32 to vector<32x16xf32>
    %83 = arith.select %7, %81, %82 : vector<32x16xi1>, vector<32x16xf32>
    %cst_26 = arith.constant dense<0xFF800000> : vector<32xf32>
    %84 = vector.multi_reduction <maximumf>, %83, %cst_26 [1] : vector<32x16xf32> to vector<32xf32>
    %85 = vector.shape_cast %84 : vector<32xf32> to vector<32x1xf32>
    %86 = vector.broadcast %85 : vector<32x1xf32> to vector<32x16xf32>
    %87 = arith.subf %83, %86 : vector<32x16xf32>
    %88 = math.exp %87 : vector<32x16xf32>
    %cst_27 = arith.constant 0.000000e+00 : f32
    %89 = vector.broadcast %cst_27 : f32 to vector<32x16xf32>
    %90 = arith.select %7, %88, %89 : vector<32x16xi1>, vector<32x16xf32>
    %cst_28 = arith.constant dense<0.000000e+00> : vector<32xf32>
    %91 = vector.multi_reduction <add>, %90, %cst_28 [1] : vector<32x16xf32> to vector<32xf32>
    %92 = vector.shape_cast %91 : vector<32xf32> to vector<32x1xf32>
    %93 = tpu.reciprocal %92 {approx = true} : vector<32x1xf32> -> vector<32x1xf32>
    %94 = vector.broadcast %93 : vector<32x1xf32> to vector<32x16xf32>
    %95 = arith.mulf %90, %94 : vector<32x16xf32>
    %96 = vector.extract_strided_slice %95 {offsets = [0, 0], sizes = [16, 16], strides = [1, 1]} : vector<32x16xf32> to vector<16x16xf32>
    %97 = vector.extract_strided_slice %61 {offsets = [0, 0], sizes = [16, 16], strides = [1, 1]} : vector<16x18xf32> to vector<16x16xf32>
    %cst_29 = arith.constant dense<0.000000e+00> : vector<16x16xf32>
    %98 = tpu.matmul %96, %97, %cst_29 {dimension_numbers = #tpu.dot_dimension_numbers<[1], [0], [0], [1], [0, 0, 1, 1], [], []>} : vector<16x16xf32>, vector<16x16xf32>, vector<16x16xf32> -> vector<16x16xf32>
    %99 = vector.extract_strided_slice %0 {offsets = [32, 0], sizes = [1, 16], strides = [1, 1]} : vector<192x32xf32> to vector<1x16xf32>
    %100 = vector.broadcast %99 : vector<1x16xf32> to vector<16x16xf32>
    %101 = arith.addf %98, %100 : vector<16x16xf32>
    %cst_30 = arith.constant 0.000000e+00 : f32
    %102 = vector.broadcast %cst_30 : f32 to vector<16x16xf32>
    %103 = arith.maximumf %101, %102 : vector<16x16xf32>
    %104 = vector.extract_strided_slice %95 {offsets = [16, 0], sizes = [16, 16], strides = [1, 1]} : vector<32x16xf32> to vector<16x16xf32>
    %105 = vector.extract_strided_slice %63 {offsets = [0, 0], sizes = [16, 16], strides = [1, 1]} : vector<16x18xf32> to vector<16x16xf32>
    %cst_31 = arith.constant dense<0.000000e+00> : vector<16x16xf32>
    %106 = tpu.matmul %104, %105, %cst_31 {dimension_numbers = #tpu.dot_dimension_numbers<[1], [0], [0], [1], [0, 0, 1, 1], [], []>} : vector<16x16xf32>, vector<16x16xf32>, vector<16x16xf32> -> vector<16x16xf32>
    %107 = vector.extract_strided_slice %0 {offsets = [72, 0], sizes = [1, 16], strides = [1, 1]} : vector<192x32xf32> to vector<1x16xf32>
    %108 = vector.broadcast %107 : vector<1x16xf32> to vector<16x16xf32>
    %109 = arith.addf %106, %108 : vector<16x16xf32>
    %cst_32 = arith.constant 0.000000e+00 : f32
    %110 = vector.broadcast %cst_32 : f32 to vector<16x16xf32>
    %111 = arith.maximumf %109, %110 : vector<16x16xf32>
    %cst_33 = arith.constant dense<0.000000e+00> : vector<8x16xf32>
    %112 = tpu.matmul %3, %103, %cst_33 {dimension_numbers = #tpu.dot_dimension_numbers<[1], [0], [0], [1], [0, 0, 1, 1], [], []>} : vector<8x16xf32>, vector<16x16xf32>, vector<8x16xf32> -> vector<8x16xf32>
    %cst_34 = arith.constant dense<0.000000e+00> : vector<8x16xf32>
    %113 = tpu.matmul %3, %111, %cst_34 {dimension_numbers = #tpu.dot_dimension_numbers<[1], [0], [0], [1], [0, 0, 1, 1], [], []>} : vector<8x16xf32>, vector<16x16xf32>, vector<8x16xf32> -> vector<8x16xf32>
    %114 = tpu.concatenate %112, %113 in 1 : vector<8x16xf32>, vector<8x16xf32> -> vector<8x32xf32>
    %115 = vector.extract_strided_slice %0 {offsets = [80, 0], sizes = [32, 16], strides = [1, 1]} : vector<192x32xf32> to vector<32x16xf32>
    %cst_35 = arith.constant dense<0.000000e+00> : vector<8x16xf32>
    %116 = tpu.matmul %114, %115, %cst_35 {dimension_numbers = #tpu.dot_dimension_numbers<[1], [0], [0], [1], [0, 0, 1, 1], [], []>} : vector<8x32xf32>, vector<32x16xf32>, vector<8x16xf32> -> vector<8x16xf32>
    %117 = vector.extract_strided_slice %0 {offsets = [112, 0], sizes = [1, 16], strides = [1, 1]} : vector<192x32xf32> to vector<1x16xf32>
    %118 = vector.broadcast %117 : vector<1x16xf32> to vector<8x16xf32>
    %119 = arith.addf %116, %118 : vector<8x16xf32>
    %cst_36 = arith.constant 0.000000e+00 : f32
    %120 = vector.broadcast %cst_36 : f32 to vector<8x16xf32>
    %121 = arith.maximumf %119, %120 : vector<8x16xf32>
    %122 = vector.extract_strided_slice %0 {offsets = [120, 0], sizes = [16, 2], strides = [1, 1]} : vector<192x32xf32> to vector<16x2xf32>
    %cst_37 = arith.constant dense<0.000000e+00> : vector<8x2xf32>
    %123 = tpu.matmul %121, %122, %cst_37 {dimension_numbers = #tpu.dot_dimension_numbers<[1], [0], [0], [1], [0, 0, 1, 1], [], []>} : vector<8x16xf32>, vector<16x2xf32>, vector<8x2xf32> -> vector<8x2xf32>
    %124 = vector.extract_strided_slice %0 {offsets = [136, 0], sizes = [1, 2], strides = [1, 1]} : vector<192x32xf32> to vector<1x2xf32>
    %125 = vector.broadcast %124 : vector<1x2xf32> to vector<8x2xf32>
    %126 = arith.addf %123, %125 : vector<8x2xf32>
    %127 = tpu.concatenate %112, %113 in 0 : vector<8x16xf32>, vector<8x16xf32> -> vector<16x16xf32>
    %128 = vector.extract_strided_slice %0 {offsets = [144, 0], sizes = [16, 16], strides = [1, 1]} : vector<192x32xf32> to vector<16x16xf32>
    %cst_38 = arith.constant dense<0.000000e+00> : vector<16x16xf32>
    %129 = tpu.matmul %127, %128, %cst_38 {dimension_numbers = #tpu.dot_dimension_numbers<[1], [0], [0], [1], [0, 0, 1, 1], [], []>} : vector<16x16xf32>, vector<16x16xf32>, vector<16x16xf32> -> vector<16x16xf32>
    %130 = vector.extract_strided_slice %0 {offsets = [160, 0], sizes = [1, 16], strides = [1, 1]} : vector<192x32xf32> to vector<1x16xf32>
    %131 = vector.broadcast %130 : vector<1x16xf32> to vector<16x16xf32>
    %132 = arith.addf %129, %131 : vector<16x16xf32>
    %cst_39 = arith.constant 0.000000e+00 : f32
    %133 = vector.broadcast %cst_39 : f32 to vector<16x16xf32>
    %134 = arith.maximumf %132, %133 : vector<16x16xf32>
    %135 = vector.extract_strided_slice %0 {offsets = [168, 0], sizes = [16, 2], strides = [1, 1]} : vector<192x32xf32> to vector<16x2xf32>
    %cst_40 = arith.constant dense<0.000000e+00> : vector<16x2xf32>
    %136 = tpu.matmul %134, %135, %cst_40 {dimension_numbers = #tpu.dot_dimension_numbers<[1], [0], [0], [1], [0, 0, 1, 1], [], []>} : vector<16x16xf32>, vector<16x2xf32>, vector<16x2xf32> -> vector<16x2xf32>
    %137 = vector.extract_strided_slice %0 {offsets = [184, 0], sizes = [1, 2], strides = [1, 1]} : vector<192x32xf32> to vector<1x2xf32>
    %138 = vector.broadcast %137 : vector<1x2xf32> to vector<16x2xf32>
    %139 = arith.addf %136, %138 : vector<16x2xf32>
    %140 = vector.extract_strided_slice %4 {offsets = [0, 0], sizes = [8, 1], strides = [1, 1]} : vector<8x3xf32> to vector<8x1xf32>
    %141 = vector.broadcast %140 : vector<8x1xf32> to vector<8x2xf32>
    %142 = arith.mulf %141, %126 : vector<8x2xf32>
    %143 = vector.extract_strided_slice %4 {offsets = [0, 1], sizes = [8, 1], strides = [1, 1]} : vector<8x3xf32> to vector<8x1xf32>
    %144 = vector.extract_strided_slice %139 {offsets = [0, 0], sizes = [8, 2], strides = [1, 1]} : vector<16x2xf32> to vector<8x2xf32>
    %145 = vector.broadcast %143 : vector<8x1xf32> to vector<8x2xf32>
    %146 = arith.mulf %145, %144 : vector<8x2xf32>
    %147 = arith.addf %142, %146 : vector<8x2xf32>
    %148 = vector.extract_strided_slice %4 {offsets = [0, 2], sizes = [8, 1], strides = [1, 1]} : vector<8x3xf32> to vector<8x1xf32>
    %149 = vector.extract_strided_slice %139 {offsets = [8, 0], sizes = [8, 2], strides = [1, 1]} : vector<16x2xf32> to vector<8x2xf32>
    %150 = vector.broadcast %148 : vector<8x1xf32> to vector<8x2xf32>
    %151 = arith.mulf %150, %149 : vector<8x2xf32>
    %152 = arith.addf %147, %151 : vector<8x2xf32>
    %c0_41 = arith.constant 0 : index
    %c0_42 = arith.constant 0 : index
    %153 = vector.load %arg5[%c0_41, %c0_42] : memref<8x2xf32, #tpu.memory_space<vmem>>, vector<8x2xf32>
    tpu.vector_store %arg5[%c0_41, %c0_42], %152 {strides = array<i32>} : memref<8x2xf32, #tpu.memory_space<vmem>>, vector<8x2xf32>,
    return
  }
}

</mosaic_0001>

<llo_original>
// kernel: forward.1
$region0: #{forward.1}
  #allocation0 [shape = 'u32[]', space=smem, size = 0x4, offset = 0x4, fixed_abs, tag = 'smem constant byte address 0x4 - core index']
  #allocation1 [shape = 'u32[144,128]{1,0:T(1,128)}', space=vmem, size = 0x12000, scoped, tag = 'internal scratch']
  %s0 = inlined_call_operand.vmem [shape: f32[192,32], index: 0, kind: input, shape index: {}]
  %s1 = inlined_call_operand.vmem [shape: f32[16,8], index: 1, kind: input, shape index: {}]
  %s2 = inlined_call_operand.vmem [shape: f32[16,16], index: 2, kind: input, shape index: {}]
  %s3 = inlined_call_operand.vmem [shape: f32[8,16], index: 3, kind: input, shape index: {}]
  %s4 = inlined_call_operand.vmem [shape: f32[8,3], index: 4, kind: input, shape index: {}]
  %s5 = inlined_call_operand.vmem [shape: f32[8,2], index: 5, kind: output, shape index: {}]
  %s6 = sld [smem:[#allocation0]]
  $region30: #{forward.1} parent=0
    _
  %s8 = ssub.s32 1, %s6
  %s9 = scalar_select 0, %s8, %s6
  // Predicated region
  $region2: #{forward.1} parent=0 // pred_check
    _
  $region3: #{forward.1} parent=0 // pred_check_branch
    %11 = sbr.rel (0) target = $region5
  $region4: #{forward.1} parent=0 // pred_region
    _
  $region5: #{forward.1} parent=0 // pred_fallthru
    _
  // Predicated region
  $region6: #{forward.1} parent=0 // pred_check
    _
  $region7: #{forward.1} parent=0 // pred_check_branch
    %13 = sbr.rel (0) target = $region9
  $region8: #{forward.1} parent=0 // pred_region
    _
  $region9: #{forward.1} parent=0 // pred_fallthru
    _
  // Predicated region
  $region10: #{forward.1} parent=0 // pred_check
    _
  $region11: #{forward.1} parent=0 // pred_check_branch
    %15 = sbr.rel (0) target = $region13
  $region12: #{forward.1} parent=0 // pred_region
    _
  $region13: #{forward.1} parent=0 // pred_fallthru
    _
  // Predicated region
  $region14: #{forward.1} parent=0 // pred_check
    _
  $region15: #{forward.1} parent=0 // pred_check_branch
    %17 = sbr.rel (0) target = $region17
  $region16: #{forward.1} parent=0 // pred_region
    _
  $region17: #{forward.1} parent=0 // pred_fallthru
    _
  // Predicated region
  $region18: #{forward.1} parent=0 // pred_check
    _
  $region19: #{forward.1} parent=0 // pred_check_branch
    %19 = sbr.rel (0) target = $region21
  $region20: #{forward.1} parent=0 // pred_region
    _
  $region21: #{forward.1} parent=0 // pred_fallthru
    _
  %v20 = vld [vmem:[%s0] sm:$0xff]
  %v21 = vld [vmem:[%s0 + $0x8] sm:$0xff]
  %v22 = vld [vmem:[%s0 + $0x10] sm:$0xff]
  %v23 = vld [vmem:[%s0 + $0x18] sm:$0xff]
  %v24 = vld [vmem:[%s0 + $0x20] sm:$0xff]
  %v25 = vld [vmem:[%s0 + $0x28] sm:$0xff]
  %v26 = vld [vmem:[%s0 + $0x30] sm:$0xff]
  %v27 = vld [vmem:[%s0 + $0x38] sm:$0xff]
  %v28 = vld [vmem:[%s0 + $0x40] sm:$0xff]
  %v29 = vld [vmem:[%s0 + $0x48] sm:$0xff]
  %v30 = vld [vmem:[%s0 + $0x50] sm:$0xff]
  %v31 = vld [vmem:[%s0 + $0x58] sm:$0xff]
  %v32 = vld [vmem:[%s0 + $0x60] sm:$0xff]
  %v33 = vld [vmem:[%s0 + $0x68] sm:$0xff]
  %v34 = vld [vmem:[%s0 + $0x70] sm:$0xff]
  %v35 = vld [vmem:[%s0 + $0x78] sm:$0xff]
  %v36 = vld [vmem:[%s0 + $0x80] sm:$0xff]
  %v37 = vld [vmem:[%s0 + $0x88] sm:$0xff]
  %v38 = vld [vmem:[%s0 + $0x90] sm:$0xff]
  %v39 = vld [vmem:[%s0 + $0x98] sm:$0xff]
  %v40 = vld [vmem:[%s0 + $0xa0] sm:$0xff]
  %v41 = vld [vmem:[%s0 + $0xa8] sm:$0xff]
  %v42 = vld [vmem:[%s0 + $0xb0] sm:$0xff]
  %v43 = vld [vmem:[%s0 + $0xb8] sm:$0xff]
  %v44 = vld [vmem:[%s1] sm:$0xff]
  %v45 = vld [vmem:[%s1 + $0x8] sm:$0xff]
  %v46 = vld [vmem:[%s2] sm:$0xff]
  %v47 = vld [vmem:[%s2 + $0x8] sm:$0xff]
  %v48 = vld [vmem:[%s3] sm:$0xff]
  %v49 = vld [vmem:[%s4] sm:$0xff]
  %vm50 = vcmp.gt.f32.partialorder %v46, 0.0
  %vm51 = vcmp.gt.f32.partialorder %v47, 0.0
  %vm52 = vcmask 64512
  %v54 = vsel %vm52, %v44, 0
  %v57 = vsel %vm52, %v45, 0
  %59 = vmatprep.subr.mxu0 0.0
  %60 = vmatpush1.msra.mxu0 %v20
  %61 = vmatprep.subr.mxu0 0.0
  %62 = vmatpush1.msra.mxu0 0.0
  %63 = vmatprep.subr.mxu0 0.0
  %64 = vmatpush1.msra.mxu0 0.0
  %65 = vmatprep.subr.mxu0 0.0
  %66 = vmatpush1.msra.mxu0 0.0
  %67 = vmatprep.subr.mxu0 0.0
  %68 = vmatpush1.msra.mxu0 0.0
  %69 = vmatprep.subr.mxu0 0.0
  %70 = vmatpush1.msra.mxu0 0.0
  %71 = vmatprep.subr.mxu0 0.0
  %72 = vmatpush1.msra.mxu0 0.0
  %73 = vmatprep.subr.mxu0 0.0
  %74 = vmatpush1.msra.mxu0 0.0
  %75 = vmatprep.subr.mxu0 0.0
  %76 = vmatpush1.msra.mxu0 0.0
  %77 = vmatprep.subr.mxu0 0.0
  %78 = vmatpush1.msra.mxu0 0.0
  %79 = vmatprep.subr.mxu0 0.0
  %80 = vmatpush1.msra.mxu0 0.0
  %81 = vmatprep.subr.mxu0 0.0
  %82 = vmatpush1.msra.mxu0 0.0
  %83 = vmatprep.subr.mxu0 0.0
  %84 = vmatpush1.msra.mxu0 0.0
  %85 = vmatprep.subr.mxu0 0.0
  %86 = vmatpush1.msra.mxu0 0.0
  %87 = vmatprep.subr.mxu0 0.0
  %88 = vmatpush1.msra.mxu0 0.0
  %89 = vmatprep.subr.mxu0 0.0
  %90 = vmatpush1.msra.mxu0 0.0
  %91 = vmatprep.subr.mxu0 0.0
  %92 = vmatpush1.msra.mxu0 0.0
  %93 = vmatprep.subr.mxu0 0.0
  %94 = vmatpush1.msra.mxu0 0.0
  %95 = vmatprep.subr.mxu0 0.0
  %96 = vmatpush1.msra.mxu0 0.0
  %97 = vmatprep.subr.mxu0 0.0
  %98 = vmatpush1.msra.mxu0 0.0
  %99 = vmatprep.subr.mxu0 0.0
  %100 = vmatpush1.msra.mxu0 0.0
  %101 = vmatprep.subr.mxu0 0.0
  %102 = vmatpush1.msra.mxu0 0.0
  %103 = vmatprep.subr.mxu0 0.0
  %104 = vmatpush1.msra.mxu0 0.0
  %105 = vmatprep.subr.mxu0 0.0
  %106 = vmatpush1.msra.mxu0 0.0
  %107 = vmatprep.subr.mxu0 0.0
  %108 = vmatpush1.msra.mxu0 0.0
  %109 = vmatprep.subr.mxu0 0.0
  %110 = vmatpush1.msra.mxu0 0.0
  %111 = vmatprep.subr.mxu0 0.0
  %112 = vmatpush1.msra.mxu0 0.0
  %113 = vmatprep.subr.mxu0 0.0
  %114 = vmatpush1.msra.mxu0 0.0
  %115 = vmatprep.subr.mxu0 0.0
  %116 = vmatpush1.msra.mxu0 0.0
  %117 = vmatprep.subr.mxu0 0.0
  %118 = vmatpush1.msra.mxu0 0.0
  %119 = vmatprep.subr.mxu0 0.0
  %120 = vmatpush1.msra.mxu0 0.0
  %121 = vmatprep.subr.mxu0 0.0
  %122 = vmatpush1.msra.mxu0 0.0
  %123 = vmatprep.mubr.f32.mxu0 0.0
  %124 = vmatmul.mubr.f32.gmra.mrb[0].mxu0 %v54
  %v125 = vpop.f32.mrb[0].mxu0
  %v126 = vadd.f32 0.0, %v125
  %v127 = vpop.f32.mrb[0].mxu0
  %128 = vmatprep.mubr.f32.mxu0 0.0
  %129 = vmatmul.mubr.f32.gmra.mrb[0].mxu0 %v57
  %v130 = vpop.f32.mrb[0].mxu0
  %v131 = vadd.f32 0.0, %v130
  %v132 = vpop.f32.mrb[0].mxu0
  %133 = vdwg.mxu0
  %134 = vmatprep.subr.mxu0 0.0
  %135 = vmatpush1.msra.mxu0 %v25
  %136 = vmatprep.subr.mxu0 0.0
  %137 = vmatpush1.msra.mxu0 0.0
  %138 = vmatprep.subr.mxu0 0.0
  %139 = vmatpush1.msra.mxu0 0.0
  %140 = vmatprep.subr.mxu0 0.0
  %141 = vmatpush1.msra.mxu0 0.0
  %142 = vmatprep.subr.mxu0 0.0
  %143 = vmatpush1.msra.mxu0 0.0
  %144 = vmatprep.subr.mxu0 0.0
  %145 = vmatpush1.msra.mxu0 0.0
  %146 = vmatprep.subr.mxu0 0.0
  %147 = vmatpush1.msra.mxu0 0.0
  %148 = vmatprep.subr.mxu0 0.0
  %149 = vmatpush1.msra.mxu0 0.0
  %150 = vmatprep.subr.mxu0 0.0
  %151 = vmatpush1.msra.mxu0 0.0
  %152 = vmatprep.subr.mxu0 0.0
  %153 = vmatpush1.msra.mxu0 0.0
  %154 = vmatprep.subr.mxu0 0.0
  %155 = vmatpush1.msra.mxu0 0.0
  %156 = vmatprep.subr.mxu0 0.0
  %157 = vmatpush1.msra.mxu0 0.0
  %158 = vmatprep.subr.mxu0 0.0
  %159 = vmatpush1.msra.mxu0 0.0
  %160 = vmatprep.subr.mxu0 0.0
  %161 = vmatpush1.msra.mxu0 0.0
  %162 = vmatprep.subr.mxu0 0.0
  %163 = vmatpush1.msra.mxu0 0.0
  %164 = vmatprep.subr.mxu0 0.0
  %165 = vmatpush1.msra.mxu0 0.0
  %166 = vmatprep.subr.mxu0 0.0
  %167 = vmatpush1.msra.mxu0 0.0
  %168 = vmatprep.subr.mxu0 0.0
  %169 = vmatpush1.msra.mxu0 0.0
  %170 = vmatprep.subr.mxu0 0.0
  %171 = vmatpush1.msra.mxu0 0.0
  %172 = vmatprep.subr.mxu0 0.0
  %173 = vmatpush1.msra.mxu0 0.0
  %174 = vmatprep.subr.mxu0 0.0
  %175 = vmatpush1.msra.mxu0 0.0
  %176 = vmatprep.subr.mxu0 0.0
  %177 = vmatpush1.msra.mxu0 0.0
  %178 = vmatprep.subr.mxu0 0.0
  %179 = vmatpush1.msra.mxu0 0.0
  %180 = vmatprep.subr.mxu0 0.0
  %181 = vmatpush1.msra.mxu0 0.0
  %182 = vmatprep.subr.mxu0 0.0
  %183 = vmatpush1.msra.mxu0 0.0
  %184 = vmatprep.subr.mxu0 0.0
  %185 = vmatpush1.msra.mxu0 0.0
  %186 = vmatprep.subr.mxu0 0.0
  %187 = vmatpush1.msra.mxu0 0.0
  %188 = vmatprep.subr.mxu0 0.0
  %189 = vmatpush1.msra.mxu0 0.0
  %190 = vmatprep.subr.mxu0 0.0
  %191 = vmatpush1.msra.mxu0 0.0
  %192 = vmatprep.subr.mxu0 0.0
  %193 = vmatpush1.msra.mxu0 0.0
  %194 = vmatprep.subr.mxu0 0.0
  %195 = vmatpush1.msra.mxu0 0.0
  %196 = vmatprep.subr.mxu0 0.0
  %197 = vmatpush1.msra.mxu0 0.0
  %198 = vmatprep.mubr.f32.mxu0 0.0
  %199 = vmatmul.mubr.f32.gmra.mrb[0].mxu0 %v54
  %v200 = vpop.f32.mrb[0].mxu0
  %v201 = vadd.f32 0.0, %v200
  %v202 = vpop.f32.mrb[0].mxu0
  %203 = vmatprep.mubr.f32.mxu0 0.0
  %204 = vmatmul.mubr.f32.gmra.mrb[0].mxu0 %v57
  %v205 = vpop.f32.mrb[0].mxu0
  %v206 = vadd.f32 0.0, %v205
  %v207 = vpop.f32.mrb[0].mxu0
  %208 = vdwg.mxu0
  %211 = vrot.lane.b32.xlu0 %v126, 111
  %v212 = vpop.permute.xlu0 %211
  %213 = vrot.lane.b32.xlu0 %v131, 111
  %v214 = vpop.permute.xlu0 %213
  %217 = vxpose.xlu0.b32.start [1/16] %v212, 128
  %218 = vxpose.xlu0.b32.cont [2/16] %v214, 128
  %219 = vxpose.xlu0.b32.cont [3/16] 0.0, 128
  %220 = vxpose.xlu0.b32.cont [4/16] 0.0, 128
  %221 = vxpose.xlu0.b32.cont [5/16] 0.0, 128
  %222 = vxpose.xlu0.b32.cont [6/16] 0.0, 128
  %223 = vxpose.xlu0.b32.cont [7/16] 0.0, 128
  %224 = vxpose.xlu0.b32.cont [8/16] 0.0, 128
  %225 = vxpose.xlu0.b32.cont [9/16] 0.0, 128
  %226 = vxpose.xlu0.b32.cont [10/16] 0.0, 128
  %227 = vxpose.xlu0.b32.cont [11/16] 0.0, 128
  %228 = vxpose.xlu0.b32.cont [12/16] 0.0, 128
  %229 = vxpose.xlu0.b32.cont [13/16] 0.0, 128
  %230 = vxpose.xlu0.b32.cont [14/16] 0.0, 128
  %231 = vxpose.xlu0.b32.cont [15/16] 0.0, 128
  %232 = vxpose.xlu0.b32.end [16/16] 0.0, 128
  %v233 = vpop.trf.xlu0
  %v234 = vpop.trf.xlu0
  %v235 = vpop.trf.xlu0
  %v236 = vpop.trf.xlu0
  %v237 = vpop.trf.xlu0
  %v238 = vpop.trf.xlu0
  %v239 = vpop.trf.xlu0
  %v240 = vpop.trf.xlu0
  %v241 = vpop.trf.xlu0
  %v242 = vpop.trf.xlu0
  %v243 = vpop.trf.xlu0
  %v244 = vpop.trf.xlu0
  %v245 = vpop.trf.xlu0
  %v246 = vpop.trf.xlu0
  %v247 = vpop.trf.xlu0
  %v248 = vpop.trf.xlu0
  %249 = vset.pattern.permute.xlu0 16
  %250 = vperm.xlu0 %249, %v126
  %v251 = vpop.permute.xlu0 %250
  %253 = vset.pattern.permute.xlu0 16
  %254 = vperm.xlu0 %253, %v131
  %v255 = vpop.permute.xlu0 %254
  %v257 = vlaneseq
  %v258 = vshrl.u32 %v257, 7
  %v259 = vsub.s32 0, %v258
  %v260 = vrot.slane %v233, %v259
  %v261 = vadd.f32 %v251, %v260
  %v262 = vadd.f32 %v255, %v260
  %265 = vrot.lane.b32.xlu0 %v201, 111
  %v266 = vpop.permute.xlu0 %265
  %267 = vrot.lane.b32.xlu0 %v206, 111
  %v268 = vpop.permute.xlu0 %267
  %271 = vxpose.xlu0.b32.start [1/16] %v266, 128
  %272 = vxpose.xlu0.b32.cont [2/16] %v268, 128
  %273 = vxpose.xlu0.b32.cont [3/16] 0.0, 128
  %274 = vxpose.xlu0.b32.cont [4/16] 0.0, 128
  %275 = vxpose.xlu0.b32.cont [5/16] 0.0, 128
  %276 = vxpose.xlu0.b32.cont [6/16] 0.0, 128
  %277 = vxpose.xlu0.b32.cont [7/16] 0.0, 128
  %278 = vxpose.xlu0.b32.cont [8/16] 0.0, 128
  %279 = vxpose.xlu0.b32.cont [9/16] 0.0, 128
  %280 = vxpose.xlu0.b32.cont [10/16] 0.0, 128
  %281 = vxpose.xlu0.b32.cont [11/16] 0.0, 128
  %282 = vxpose.xlu0.b32.cont [12/16] 0.0, 128
  %283 = vxpose.xlu0.b32.cont [13/16] 0.0, 128
  %284 = vxpose.xlu0.b32.cont [14/16] 0.0, 128
  %285 = vxpose.xlu0.b32.cont [15/16] 0.0, 128
  %286 = vxpose.xlu0.b32.end [16/16] 0.0, 128
  %v287 = vpop.trf.xlu0
  %v288 = vpop.trf.xlu0
  %v289 = vpop.trf.xlu0
  %v290 = vpop.trf.xlu0
  %v291 = vpop.trf.xlu0
  %v292 = vpop.trf.xlu0
  %v293 = vpop.trf.xlu0
  %v294 = vpop.trf.xlu0
  %v295 = vpop.trf.xlu0
  %v296 = vpop.trf.xlu0
  %v297 = vpop.trf.xlu0
  %v298 = vpop.trf.xlu0
  %v299 = vpop.trf.xlu0
  %v300 = vpop.trf.xlu0
  %v301 = vpop.trf.xlu0
  %v302 = vpop.trf.xlu0
  %303 = vset.pattern.permute.xlu0 16
  %304 = vperm.xlu0 %303, %v201
  %v305 = vpop.permute.xlu0 %304
  %307 = vset.pattern.permute.xlu0 16
  %308 = vperm.xlu0 %307, %v206
  %v309 = vpop.permute.xlu0 %308
  %v311 = vlaneseq
  %v312 = vshrl.u32 %v311, 7
  %v313 = vsub.s32 0, %v312
  %v314 = vrot.slane %v287, %v313
  %v315 = vadd.f32 %v305, %v314
  %v316 = vadd.f32 %v309, %v314
  %vm317 = vcmp.gt.f32.partialorder %v261, 0.0
  %vm318 = vcmp.gt.f32.partialorder %v262, 0.0
  %vm319 = vcmp.gt.f32.partialorder %v315, 0.0
  %vm320 = vcmp.gt.f32.partialorder %v316, 0.0
  %v321 = vmul.f32 %v261, 0.2
  %v322 = vmul.f32 %v262, 0.2
  %v323 = vmul.f32 %v315, 0.2
  %v324 = vmul.f32 %v316, 0.2
  %v325 = vsel %vm317, %v261, %v321
  %v326 = vsel %vm318, %v262, %v322
  %v327 = vsel %vm319, %v315, %v323
  %v328 = vsel %vm320, %v316, %v324
  %v329 = vsel %vm50, %v325, -1e+30
  %v330 = vsel %vm51, %v326, -1e+30
  %v331 = vsel %vm50, %v327, -1e+30
  %v332 = vsel %vm51, %v328, -1e+30
  %vm333 = vcmask 130048
  %v334 = vsel %vm333, %v329, -inf
  %335 = vmax.xlane.f32.xlu0 %v334
  %v336 = vpop.xlane.xlu0 %335
  %v337 = vsel %vm333, %v330, -inf
  %338 = vmax.xlane.f32.xlu0 %v337
  %v339 = vpop.xlane.xlu0 %338
  %v340 = vsel %vm333, %v331, -inf
  %341 = vmax.xlane.f32.xlu0 %v340
  %v342 = vpop.xlane.xlu0 %341
  %v343 = vsel %vm333, %v332, -inf
  %344 = vmax.xlane.f32.xlu0 %v343
  %v345 = vpop.xlane.xlu0 %344
  %v346 = vsub.f32 %v329, %v336
  %v347 = vsub.f32 %v330, %v339
  %v348 = vsub.f32 %v331, %v342
  %v349 = vsub.f32 %v332, %v345
  %v350 = vmul.f32 %v346, 1.442695
  %v351 = vpow.pop %v350
  %v352 = vmul.f32 %v347, 1.442695
  %v353 = vpow.pop %v352
  %v354 = vmul.f32 %v348, 1.442695
  %v355 = vpow.pop %v354
  %v356 = vmul.f32 %v349, 1.442695
  %v357 = vpow.pop %v356
  %v358 = vsel %vm50, %v351, 0.0
  %v359 = vsel %vm51, %v353, 0.0
  %v360 = vsel %vm50, %v355, 0.0
  %v361 = vsel %vm51, %v357, 0.0
  %v362 = vsel %vm333, %v358, 0.0
  %363 = vadd.xlane.f32.xlu0 %v362
  %v364 = vpop.xlane.xlu0 %363
  %v365 = vsel %vm333, %v359, 0.0
  %366 = vadd.xlane.f32.xlu0 %v365
  %v367 = vpop.xlane.xlu0 %366
  %v368 = vsel %vm333, %v360, 0.0
  %369 = vadd.xlane.f32.xlu0 %v368
  %v370 = vpop.xlane.xlu0 %369
  %v371 = vsel %vm333, %v361, 0.0
  %372 = vadd.xlane.f32.xlu0 %v371
  %v373 = vpop.xlane.xlu0 %372
  %v374 = vrcp.pop %v364
  %v375 = vrcp.pop %v367
  %v376 = vrcp.pop %v370
  %v377 = vrcp.pop %v373
  %v378 = vmul.f32 %v358, %v374
  %v379 = vmul.f32 %v359, %v375
  %v380 = vmul.f32 %v360, %v376
  %v381 = vmul.f32 %v361, %v377
  %v382 = vlaneseq
  %v383 = vshrl.u32 %v382, 7
  %v384 = vsub.s32 0, %v383
  %v385 = vrot.slane %v21, %v384
  %v387 = vsel %vm333, %v378, 0
  %v390 = vsel %vm333, %v379, 0
  %392 = vmatprep.subr.mxu0 0.0
  %393 = vmatpush1.msra.mxu0 %v126
  %394 = vmatprep.subr.mxu0 0.0
  %395 = vmatpush1.msra.mxu0 %v131
  %396 = vmatprep.subr.mxu0 0.0
  %397 = vmatpush1.msra.mxu0 0.0
  %398 = vmatprep.subr.mxu0 0.0
  %399 = vmatpush1.msra.mxu0 0.0
  %400 = vmatprep.subr.mxu0 0.0
  %401 = vmatpush1.msra.mxu0 0.0
  %402 = vmatprep.subr.mxu0 0.0
  %403 = vmatpush1.msra.mxu0 0.0
  %404 = vmatprep.subr.mxu0 0.0
  %405 = vmatpush1.msra.mxu0 0.0
  %406 = vmatprep.subr.mxu0 0.0
  %407 = vmatpush1.msra.mxu0 0.0
  %408 = vmatprep.subr.mxu0 0.0
  %409 = vmatpush1.msra.mxu0 0.0
  %410 = vmatprep.subr.mxu0 0.0
  %411 = vmatpush1.msra.mxu0 0.0
  %412 = vmatprep.subr.mxu0 0.0
  %413 = vmatpush1.msra.mxu0 0.0
  %414 = vmatprep.subr.mxu0 0.0
  %415 = vmatpush1.msra.mxu0 0.0
  %416 = vmatprep.subr.mxu0 0.0
  %417 = vmatpush1.msra.mxu0 0.0
  %418 = vmatprep.subr.mxu0 0.0
  %419 = vmatpush1.msra.mxu0 0.0
  %420 = vmatprep.subr.mxu0 0.0
  %421 = vmatpush1.msra.mxu0 0.0
  %422 = vmatprep.subr.mxu0 0.0
  %423 = vmatpush1.msra.mxu0 0.0
  %424 = vmatprep.subr.mxu0 0.0
  %425 = vmatpush1.msra.mxu0 0.0
  %426 = vmatprep.subr.mxu0 0.0
  %427 = vmatpush1.msra.mxu0 0.0
  %428 = vmatprep.subr.mxu0 0.0
  %429 = vmatpush1.msra.mxu0 0.0
  %430 = vmatprep.subr.mxu0 0.0
  %431 = vmatpush1.msra.mxu0 0.0
  %432 = vmatprep.subr.mxu0 0.0
  %433 = vmatpush1.msra.mxu0 0.0
  %434 = vmatprep.subr.mxu0 0.0
  %435 = vmatpush1.msra.mxu0 0.0
  %436 = vmatprep.subr.mxu0 0.0
  %437 = vmatpush1.msra.mxu0 0.0
  %438 = vmatprep.subr.mxu0 0.0
  %439 = vmatpush1.msra.mxu0 0.0
  %440 = vmatprep.subr.mxu0 0.0
  %441 = vmatpush1.msra.mxu0 0.0
  %442 = vmatprep.subr.mxu0 0.0
  %443 = vmatpush1.msra.mxu0 0.0
  %444 = vmatprep.subr.mxu0 0.0
  %445 = vmatpush1.msra.mxu0 0.0
  %446 = vmatprep.subr.mxu0 0.0
  %447 = vmatpush1.msra.mxu0 0.0
  %448 = vmatprep.subr.mxu0 0.0
  %449 = vmatpush1.msra.mxu0 0.0
  %450 = vmatprep.subr.mxu0 0.0
  %451 = vmatpush1.msra.mxu0 0.0
  %452 = vmatprep.subr.mxu0 0.0
  %453 = vmatpush1.msra.mxu0 0.0
  %454 = vmatprep.subr.mxu0 0.0
  %455 = vmatpush1.msra.mxu0 0.0
  %456 = vmatprep.mubr.f32.mxu0 0.0
  %457 = vmatmul.mubr.f32.gmra.mrb[0].mxu0 %v387
  %v458 = vpop.f32.mrb[0].mxu0
  %v459 = vadd.f32 %v385, %v458
  %v460 = vpop.f32.mrb[0].mxu0
  %461 = vmatprep.mubr.f32.mxu0 0.0
  %462 = vmatmul.mubr.f32.gmra.mrb[0].mxu0 %v390
  %v463 = vpop.f32.mrb[0].mxu0
  %v464 = vadd.f32 %v385, %v463
  %v465 = vpop.f32.mrb[0].mxu0
  %466 = vdwg.mxu0
  %v467 = vmax.f32 %v459, 0.0
  %v468 = vmax.f32 %v464, 0.0
  %v469 = vlaneseq
  %v470 = vshrl.u32 %v469, 7
  %v471 = vsub.s32 0, %v470
  %v472 = vrot.slane %v26, %v471
  %v474 = vsel %vm333, %v380, 0
  %v477 = vsel %vm333, %v381, 0
  %479 = vmatprep.subr.mxu0 0.0
  %480 = vmatpush1.msra.mxu0 %v201
  %481 = vmatprep.subr.mxu0 0.0
  %482 = vmatpush1.msra.mxu0 %v206
  %483 = vmatprep.subr.mxu0 0.0
  %484 = vmatpush1.msra.mxu0 0.0
  %485 = vmatprep.subr.mxu0 0.0
  %486 = vmatpush1.msra.mxu0 0.0
  %487 = vmatprep.subr.mxu0 0.0
  %488 = vmatpush1.msra.mxu0 0.0
  %489 = vmatprep.subr.mxu0 0.0
  %490 = vmatpush1.msra.mxu0 0.0
  %491 = vmatprep.subr.mxu0 0.0
  %492 = vmatpush1.msra.mxu0 0.0
  %493 = vmatprep.subr.mxu0 0.0
  %494 = vmatpush1.msra.mxu0 0.0
  %495 = vmatprep.subr.mxu0 0.0
  %496 = vmatpush1.msra.mxu0 0.0
  %497 = vmatprep.subr.mxu0 0.0
  %498 = vmatpush1.msra.mxu0 0.0
  %499 = vmatprep.subr.mxu0 0.0
  %500 = vmatpush1.msra.mxu0 0.0
  %501 = vmatprep.subr.mxu0 0.0
  %502 = vmatpush1.msra.mxu0 0.0
  %503 = vmatprep.subr.mxu0 0.0
  %504 = vmatpush1.msra.mxu0 0.0
  %505 = vmatprep.subr.mxu0 0.0
  %506 = vmatpush1.msra.mxu0 0.0
  %507 = vmatprep.subr.mxu0 0.0
  %508 = vmatpush1.msra.mxu0 0.0
  %509 = vmatprep.subr.mxu0 0.0
  %510 = vmatpush1.msra.mxu0 0.0
  %511 = vmatprep.subr.mxu0 0.0
  %512 = vmatpush1.msra.mxu0 0.0
  %513 = vmatprep.subr.mxu0 0.0
  %514 = vmatpush1.msra.mxu0 0.0
  %515 = vmatprep.subr.mxu0 0.0
  %516 = vmatpush1.msra.mxu0 0.0
  %517 = vmatprep.subr.mxu0 0.0
  %518 = vmatpush1.msra.mxu0 0.0
  %519 = vmatprep.subr.mxu0 0.0
  %520 = vmatpush1.msra.mxu0 0.0
  %521 = vmatprep.subr.mxu0 0.0
  %522 = vmatpush1.msra.mxu0 0.0
  %523 = vmatprep.subr.mxu0 0.0
  %524 = vmatpush1.msra.mxu0 0.0
  %525 = vmatprep.subr.mxu0 0.0
  %526 = vmatpush1.msra.mxu0 0.0
  %527 = vmatprep.subr.mxu0 0.0
  %528 = vmatpush1.msra.mxu0 0.0
  %529 = vmatprep.subr.mxu0 0.0
  %530 = vmatpush1.msra.mxu0 0.0
  %531 = vmatprep.subr.mxu0 0.0
  %532 = vmatpush1.msra.mxu0 0.0
  %533 = vmatprep.subr.mxu0 0.0
  %534 = vmatpush1.msra.mxu0 0.0
  %535 = vmatprep.subr.mxu0 0.0
  %536 = vmatpush1.msra.mxu0 0.0
  %537 = vmatprep.subr.mxu0 0.0
  %538 = vmatpush1.msra.mxu0 0.0
  %539 = vmatprep.subr.mxu0 0.0
  %540 = vmatpush1.msra.mxu0 0.0
  %541 = vmatprep.subr.mxu0 0.0
  %542 = vmatpush1.msra.mxu0 0.0
  %543 = vmatprep.mubr.f32.mxu0 0.0
  %544 = vmatmul.mubr.f32.gmra.mrb[0].mxu0 %v474
  %v545 = vpop.f32.mrb[0].mxu0
  %v546 = vadd.f32 %v472, %v545
  %v547 = vpop.f32.mrb[0].mxu0
  %548 = vmatprep.mubr.f32.mxu0 0.0
  %549 = vmatmul.mubr.f32.gmra.mrb[0].mxu0 %v477
  %v550 = vpop.f32.mrb[0].mxu0
  %v551 = vadd.f32 %v472, %v550
  %v552 = vpop.f32.mrb[0].mxu0
  %553 = vdwg.mxu0
  %v554 = vmax.f32 %v546, 0.0
  %v555 = vmax.f32 %v551, 0.0
  %v557 = vsel %vm333, %v467, 0
  %v560 = vsel %vm333, %v468, 0
  %562 = vmatprep.subr.mxu0 0.0
  %563 = vmatpush1.msra.mxu0 %v22
  %564 = vmatprep.subr.mxu0 0.0
  %565 = vmatpush1.msra.mxu0 %v23
  %566 = vmatprep.subr.mxu0 0.0
  %567 = vmatpush1.msra.mxu0 0.0
  %568 = vmatprep.subr.mxu0 0.0
  %569 = vmatpush1.msra.mxu0 0.0
  %570 = vmatprep.subr.mxu0 0.0
  %571 = vmatpush1.msra.mxu0 0.0
  %572 = vmatprep.subr.mxu0 0.0
  %573 = vmatpush1.msra.mxu0 0.0
  %574 = vmatprep.subr.mxu0 0.0
  %575 = vmatpush1.msra.mxu0 0.0
  %576 = vmatprep.subr.mxu0 0.0
  %577 = vmatpush1.msra.mxu0 0.0
  %578 = vmatprep.subr.mxu0 0.0
  %579 = vmatpush1.msra.mxu0 0.0
  %580 = vmatprep.subr.mxu0 0.0
  %581 = vmatpush1.msra.mxu0 0.0
  %582 = vmatprep.subr.mxu0 0.0
  %583 = vmatpush1.msra.mxu0 0.0
  %584 = vmatprep.subr.mxu0 0.0
  %585 = vmatpush1.msra.mxu0 0.0
  %586 = vmatprep.subr.mxu0 0.0
  %587 = vmatpush1.msra.mxu0 0.0
  %588 = vmatprep.subr.mxu0 0.0
  %589 = vmatpush1.msra.mxu0 0.0
  %590 = vmatprep.subr.mxu0 0.0
  %591 = vmatpush1.msra.mxu0 0.0
  %592 = vmatprep.subr.mxu0 0.0
  %593 = vmatpush1.msra.mxu0 0.0
  %594 = vmatprep.subr.mxu0 0.0
  %595 = vmatpush1.msra.mxu0 0.0
  %596 = vmatprep.subr.mxu0 0.0
  %597 = vmatpush1.msra.mxu0 0.0
  %598 = vmatprep.subr.mxu0 0.0
  %599 = vmatpush1.msra.mxu0 0.0
  %600 = vmatprep.subr.mxu0 0.0
  %601 = vmatpush1.msra.mxu0 0.0
  %602 = vmatprep.subr.mxu0 0.0
  %603 = vmatpush1.msra.mxu0 0.0
  %604 = vmatprep.subr.mxu0 0.0
  %605 = vmatpush1.msra.mxu0 0.0
  %606 = vmatprep.subr.mxu0 0.0
  %607 = vmatpush1.msra.mxu0 0.0
  %608 = vmatprep.subr.mxu0 0.0
  %609 = vmatpush1.msra.mxu0 0.0
  %610 = vmatprep.subr.mxu0 0.0
  %611 = vmatpush1.msra.mxu0 0.0
  %612 = vmatprep.subr.mxu0 0.0
  %613 = vmatpush1.msra.mxu0 0.0
  %614 = vmatprep.subr.mxu0 0.0
  %615 = vmatpush1.msra.mxu0 0.0
  %616 = vmatprep.subr.mxu0 0.0
  %617 = vmatpush1.msra.mxu0 0.0
  %618 = vmatprep.subr.mxu0 0.0
  %619 = vmatpush1.msra.mxu0 0.0
  %620 = vmatprep.subr.mxu0 0.0
  %621 = vmatpush1.msra.mxu0 0.0
  %622 = vmatprep.subr.mxu0 0.0
  %623 = vmatpush1.msra.mxu0 0.0
  %624 = vmatprep.subr.mxu0 0.0
  %625 = vmatpush1.msra.mxu0 0.0
  %626 = vmatprep.mubr.f32.mxu0 0.0
  %627 = vmatmul.mubr.f32.gmra.mrb[0].mxu0 %v557
  %v628 = vpop.f32.mrb[0].mxu0
  %v629 = vadd.f32 0.0, %v628
  %v630 = vpop.f32.mrb[0].mxu0
  %631 = vmatprep.mubr.f32.mxu0 0.0
  %632 = vmatmul.mubr.f32.gmra.mrb[0].mxu0 %v560
  %v633 = vpop.f32.mrb[0].mxu0
  %v634 = vadd.f32 0.0, %v633
  %v635 = vpop.f32.mrb[0].mxu0
  %636 = vdwg.mxu0
  %v638 = vsel %vm333, %v554, 0
  %v641 = vsel %vm333, %v555, 0
  %643 = vmatprep.subr.mxu0 0.0
  %644 = vmatpush1.msra.mxu0 %v27
  %645 = vmatprep.subr.mxu0 0.0
  %646 = vmatpush1.msra.mxu0 %v28
  %647 = vmatprep.subr.mxu0 0.0
  %648 = vmatpush1.msra.mxu0 0.0
  %649 = vmatprep.subr.mxu0 0.0
  %650 = vmatpush1.msra.mxu0 0.0
  %651 = vmatprep.subr.mxu0 0.0
  %652 = vmatpush1.msra.mxu0 0.0
  %653 = vmatprep.subr.mxu0 0.0
  %654 = vmatpush1.msra.mxu0 0.0
  %655 = vmatprep.subr.mxu0 0.0
  %656 = vmatpush1.msra.mxu0 0.0
  %657 = vmatprep.subr.mxu0 0.0
  %658 = vmatpush1.msra.mxu0 0.0
  %659 = vmatprep.subr.mxu0 0.0
  %660 = vmatpush1.msra.mxu0 0.0
  %661 = vmatprep.subr.mxu0 0.0
  %662 = vmatpush1.msra.mxu0 0.0
  %663 = vmatprep.subr.mxu0 0.0
  %664 = vmatpush1.msra.mxu0 0.0
  %665 = vmatprep.subr.mxu0 0.0
  %666 = vmatpush1.msra.mxu0 0.0
  %667 = vmatprep.subr.mxu0 0.0
  %668 = vmatpush1.msra.mxu0 0.0
  %669 = vmatprep.subr.mxu0 0.0
  %670 = vmatpush1.msra.mxu0 0.0
  %671 = vmatprep.subr.mxu0 0.0
  %672 = vmatpush1.msra.mxu0 0.0
  %673 = vmatprep.subr.mxu0 0.0
  %674 = vmatpush1.msra.mxu0 0.0
  %675 = vmatprep.subr.mxu0 0.0
  %676 = vmatpush1.msra.mxu0 0.0
  %677 = vmatprep.subr.mxu0 0.0
  %678 = vmatpush1.msra.mxu0 0.0
  %679 = vmatprep.subr.mxu0 0.0
  %680 = vmatpush1.msra.mxu0 0.0
  %681 = vmatprep.subr.mxu0 0.0
  %682 = vmatpush1.msra.mxu0 0.0
  %683 = vmatprep.subr.mxu0 0.0
  %684 = vmatpush1.msra.mxu0 0.0
  %685 = vmatprep.subr.mxu0 0.0
  %686 = vmatpush1.msra.mxu0 0.0
  %687 = vmatprep.subr.mxu0 0.0
  %688 = vmatpush1.msra.mxu0 0.0
  %689 = vmatprep.subr.mxu0 0.0
  %690 = vmatpush1.msra.mxu0 0.0
  %691 = vmatprep.subr.mxu0 0.0
  %692 = vmatpush1.msra.mxu0 0.0
  %693 = vmatprep.subr.mxu0 0.0
  %694 = vmatpush1.msra.mxu0 0.0
  %695 = vmatprep.subr.mxu0 0.0
  %696 = vmatpush1.msra.mxu0 0.0
  %697 = vmatprep.subr.mxu0 0.0
  %698 = vmatpush1.msra.mxu0 0.0
  %699 = vmatprep.subr.mxu0 0.0
  %700 = vmatpush1.msra.mxu0 0.0
  %701 = vmatprep.subr.mxu0 0.0
  %702 = vmatpush1.msra.mxu0 0.0
  %703 = vmatprep.subr.mxu0 0.0
  %704 = vmatpush1.msra.mxu0 0.0
  %705 = vmatprep.subr.mxu0 0.0
  %706 = vmatpush1.msra.mxu0 0.0
  %707 = vmatprep.mubr.f32.mxu0 0.0
  %708 = vmatmul.mubr.f32.gmra.mrb[0].mxu0 %v638
  %v709 = vpop.f32.mrb[0].mxu0
  %v710 = vadd.f32 0.0, %v709
  %v711 = vpop.f32.mrb[0].mxu0
  %712 = vmatprep.mubr.f32.mxu0 0.0
  %713 = vmatmul.mubr.f32.gmra.mrb[0].mxu0 %v641
  %v714 = vpop.f32.mrb[0].mxu0
  %v715 = vadd.f32 0.0, %v714
  %v716 = vpop.f32.mrb[0].mxu0
  %717 = vdwg.mxu0
  %720 = vrot.lane.b32.xlu0 %v629, 111
  %v721 = vpop.permute.xlu0 %720
  %722 = vrot.lane.b32.xlu0 %v634, 111
  %v723 = vpop.permute.xlu0 %722
  %726 = vxpose.xlu0.b32.start [1/16] %v721, 128
  %727 = vxpose.xlu0.b32.cont [2/16] %v723, 128
  %728 = vxpose.xlu0.b32.cont [3/16] 0.0, 128
  %729 = vxpose.xlu0.b32.cont [4/16] 0.0, 128
  %730 = vxpose.xlu0.b32.cont [5/16] 0.0, 128
  %731 = vxpose.xlu0.b32.cont [6/16] 0.0, 128
  %732 = vxpose.xlu0.b32.cont [7/16] 0.0, 128
  %733 = vxpose.xlu0.b32.cont [8/16] 0.0, 128
  %734 = vxpose.xlu0.b32.cont [9/16] 0.0, 128
  %735 = vxpose.xlu0.b32.cont [10/16] 0.0, 128
  %736 = vxpose.xlu0.b32.cont [11/16] 0.0, 128
  %737 = vxpose.xlu0.b32.cont [12/16] 0.0, 128
  %738 = vxpose.xlu0.b32.cont [13/16] 0.0, 128
  %739 = vxpose.xlu0.b32.cont [14/16] 0.0, 128
  %740 = vxpose.xlu0.b32.cont [15/16] 0.0, 128
  %741 = vxpose.xlu0.b32.end [16/16] 0.0, 128
  %v742 = vpop.trf.xlu0
  %v743 = vpop.trf.xlu0
  %v744 = vpop.trf.xlu0
  %v745 = vpop.trf.xlu0
  %v746 = vpop.trf.xlu0
  %v747 = vpop.trf.xlu0
  %v748 = vpop.trf.xlu0
  %v749 = vpop.trf.xlu0
  %v750 = vpop.trf.xlu0
  %v751 = vpop.trf.xlu0
  %v752 = vpop.trf.xlu0
  %v753 = vpop.trf.xlu0
  %v754 = vpop.trf.xlu0
  %v755 = vpop.trf.xlu0
  %v756 = vpop.trf.xlu0
  %v757 = vpop.trf.xlu0
  %758 = vset.pattern.permute.xlu0 16
  %759 = vperm.xlu0 %758, %v629
  %v760 = vpop.permute.xlu0 %759
  %762 = vset.pattern.permute.xlu0 16
  %763 = vperm.xlu0 %762, %v634
  %v764 = vpop.permute.xlu0 %763
  %v766 = vlaneseq
  %v767 = vshrl.u32 %v766, 7
  %v768 = vsub.s32 0, %v767
  %v769 = vrot.slane %v742, %v768
  %v770 = vadd.f32 %v760, %v769
  %v771 = vadd.f32 %v764, %v769
  %774 = vrot.lane.b32.xlu0 %v710, 111
  %v775 = vpop.permute.xlu0 %774
  %776 = vrot.lane.b32.xlu0 %v715, 111
  %v777 = vpop.permute.xlu0 %776
  %780 = vxpose.xlu0.b32.start [1/16] %v775, 128
  %781 = vxpose.xlu0.b32.cont [2/16] %v777, 128
  %782 = vxpose.xlu0.b32.cont [3/16] 0.0, 128
  %783 = vxpose.xlu0.b32.cont [4/16] 0.0, 128
  %784 = vxpose.xlu0.b32.cont [5/16] 0.0, 128
  %785 = vxpose.xlu0.b32.cont [6/16] 0.0, 128
  %786 = vxpose.xlu0.b32.cont [7/16] 0.0, 128
  %787 = vxpose.xlu0.b32.cont [8/16] 0.0, 128
  %788 = vxpose.xlu0.b32.cont [9/16] 0.0, 128
  %789 = vxpose.xlu0.b32.cont [10/16] 0.0, 128
  %790 = vxpose.xlu0.b32.cont [11/16] 0.0, 128
  %791 = vxpose.xlu0.b32.cont [12/16] 0.0, 128
  %792 = vxpose.xlu0.b32.cont [13/16] 0.0, 128
  %793 = vxpose.xlu0.b32.cont [14/16] 0.0, 128
  %794 = vxpose.xlu0.b32.cont [15/16] 0.0, 128
  %795 = vxpose.xlu0.b32.end [16/16] 0.0, 128
  %v796 = vpop.trf.xlu0
  %v797 = vpop.trf.xlu0
  %v798 = vpop.trf.xlu0
  %v799 = vpop.trf.xlu0
  %v800 = vpop.trf.xlu0
  %v801 = vpop.trf.xlu0
  %v802 = vpop.trf.xlu0
  %v803 = vpop.trf.xlu0
  %v804 = vpop.trf.xlu0
  %v805 = vpop.trf.xlu0
  %v806 = vpop.trf.xlu0
  %v807 = vpop.trf.xlu0
  %v808 = vpop.trf.xlu0
  %v809 = vpop.trf.xlu0
  %v810 = vpop.trf.xlu0
  %v811 = vpop.trf.xlu0
  %812 = vset.pattern.permute.xlu0 16
  %813 = vperm.xlu0 %812, %v710
  %v814 = vpop.permute.xlu0 %813
  %816 = vset.pattern.permute.xlu0 16
  %817 = vperm.xlu0 %816, %v715
  %v818 = vpop.permute.xlu0 %817
  %v820 = vlaneseq
  %v821 = vshrl.u32 %v820, 7
  %v822 = vsub.s32 0, %v821
  %v823 = vrot.slane %v796, %v822
  %v824 = vadd.f32 %v814, %v823
  %v825 = vadd.f32 %v818, %v823
  %vm826 = vcmp.gt.f32.partialorder %v770, 0.0
  %vm827 = vcmp.gt.f32.partialorder %v771, 0.0
  %vm828 = vcmp.gt.f32.partialorder %v824, 0.0
  %vm829 = vcmp.gt.f32.partialorder %v825, 0.0
  %v830 = vmul.f32 %v770, 0.2
  %v831 = vmul.f32 %v771, 0.2
  %v832 = vmul.f32 %v824, 0.2
  %v833 = vmul.f32 %v825, 0.2
  %v834 = vsel %vm826, %v770, %v830
  %v835 = vsel %vm827, %v771, %v831
  %v836 = vsel %vm828, %v824, %v832
  %v837 = vsel %vm829, %v825, %v833
  %v838 = vsel %vm50, %v834, -1e+30
  %v839 = vsel %vm51, %v835, -1e+30
  %v840 = vsel %vm50, %v836, -1e+30
  %v841 = vsel %vm51, %v837, -1e+30
  %v842 = vsel %vm333, %v838, -inf
  %843 = vmax.xlane.f32.xlu0 %v842
  %v844 = vpop.xlane.xlu0 %843
  %v845 = vsel %vm333, %v839, -inf
  %846 = vmax.xlane.f32.xlu0 %v845
  %v847 = vpop.xlane.xlu0 %846
  %v848 = vsel %vm333, %v840, -inf
  %849 = vmax.xlane.f32.xlu0 %v848
  %v850 = vpop.xlane.xlu0 %849
  %v851 = vsel %vm333, %v841, -inf
  %852 = vmax.xlane.f32.xlu0 %v851
  %v853 = vpop.xlane.xlu0 %852
  %v854 = vsub.f32 %v838, %v844
  %v855 = vsub.f32 %v839, %v847
  %v856 = vsub.f32 %v840, %v850
  %v857 = vsub.f32 %v841, %v853
  %v858 = vmul.f32 %v854, 1.442695
  %v859 = vpow.pop %v858
  %v860 = vmul.f32 %v855, 1.442695
  %v861 = vpow.pop %v860
  %v862 = vmul.f32 %v856, 1.442695
  %v863 = vpow.pop %v862
  %v864 = vmul.f32 %v857, 1.442695
  %v865 = vpow.pop %v864
  %v866 = vsel %vm50, %v859, 0.0
  %v867 = vsel %vm51, %v861, 0.0
  %v868 = vsel %vm50, %v863, 0.0
  %v869 = vsel %vm51, %v865, 0.0
  %v870 = vsel %vm333, %v866, 0.0
  %871 = vadd.xlane.f32.xlu0 %v870
  %v872 = vpop.xlane.xlu0 %871
  %v873 = vsel %vm333, %v867, 0.0
  %874 = vadd.xlane.f32.xlu0 %v873
  %v875 = vpop.xlane.xlu0 %874
  %v876 = vsel %vm333, %v868, 0.0
  %877 = vadd.xlane.f32.xlu0 %v876
  %v878 = vpop.xlane.xlu0 %877
  %v879 = vsel %vm333, %v869, 0.0
  %880 = vadd.xlane.f32.xlu0 %v879
  %v881 = vpop.xlane.xlu0 %880
  %v882 = vrcp.pop %v872
  %v883 = vrcp.pop %v875
  %v884 = vrcp.pop %v878
  %v885 = vrcp.pop %v881
  %v886 = vmul.f32 %v866, %v882
  %v887 = vmul.f32 %v867, %v883
  %v888 = vmul.f32 %v868, %v884
  %v889 = vmul.f32 %v869, %v885
  %v890 = vlaneseq
  %v891 = vshrl.u32 %v890, 7
  %v892 = vsub.s32 0, %v891
  %v893 = vrot.slane %v24, %v892
  %v895 = vsel %vm333, %v886, 0
  %v898 = vsel %vm333, %v887, 0
  %900 = vmatprep.subr.mxu0 0.0
  %901 = vmatpush1.msra.mxu0 %v629
  %902 = vmatprep.subr.mxu0 0.0
  %903 = vmatpush1.msra.mxu0 %v634
  %904 = vmatprep.subr.mxu0 0.0
  %905 = vmatpush1.msra.mxu0 0.0
  %906 = vmatprep.subr.mxu0 0.0
  %907 = vmatpush1.msra.mxu0 0.0
  %908 = vmatprep.subr.mxu0 0.0
  %909 = vmatpush1.msra.mxu0 0.0
  %910 = vmatprep.subr.mxu0 0.0
  %911 = vmatpush1.msra.mxu0 0.0
  %912 = vmatprep.subr.mxu0 0.0
  %913 = vmatpush1.msra.mxu0 0.0
  %914 = vmatprep.subr.mxu0 0.0
  %915 = vmatpush1.msra.mxu0 0.0
  %916 = vmatprep.subr.mxu0 0.0
  %917 = vmatpush1.msra.mxu0 0.0
  %918 = vmatprep.subr.mxu0 0.0
  %919 = vmatpush1.msra.mxu0 0.0
  %920 = vmatprep.subr.mxu0 0.0
  %921 = vmatpush1.msra.mxu0 0.0
  %922 = vmatprep.subr.mxu0 0.0
  %923 = vmatpush1.msra.mxu0 0.0
  %924 = vmatprep.subr.mxu0 0.0
  %925 = vmatpush1.msra.mxu0 0.0
  %926 = vmatprep.subr.mxu0 0.0
  %927 = vmatpush1.msra.mxu0 0.0
  %928 = vmatprep.subr.mxu0 0.0
  %929 = vmatpush1.msra.mxu0 0.0
  %930 = vmatprep.subr.mxu0 0.0
  %931 = vmatpush1.msra.mxu0 0.0
  %932 = vmatprep.subr.mxu0 0.0
  %933 = vmatpush1.msra.mxu0 0.0
  %934 = vmatprep.subr.mxu0 0.0
  %935 = vmatpush1.msra.mxu0 0.0
  %936 = vmatprep.subr.mxu0 0.0
  %937 = vmatpush1.msra.mxu0 0.0
  %938 = vmatprep.subr.mxu0 0.0
  %939 = vmatpush1.msra.mxu0 0.0
  %940 = vmatprep.subr.mxu0 0.0
  %941 = vmatpush1.msra.mxu0 0.0
  %942 = vmatprep.subr.mxu0 0.0
  %943 = vmatpush1.msra.mxu0 0.0
  %944 = vmatprep.subr.mxu0 0.0
  %945 = vmatpush1.msra.mxu0 0.0
  %946 = vmatprep.subr.mxu0 0.0
  %947 = vmatpush1.msra.mxu0 0.0
  %948 = vmatprep.subr.mxu0 0.0
  %949 = vmatpush1.msra.mxu0 0.0
  %950 = vmatprep.subr.mxu0 0.0
  %951 = vmatpush1.msra.mxu0 0.0
  %952 = vmatprep.subr.mxu0 0.0
  %953 = vmatpush1.msra.mxu0 0.0
  %954 = vmatprep.subr.mxu0 0.0
  %955 = vmatpush1.msra.mxu0 0.0
  %956 = vmatprep.subr.mxu0 0.0
  %957 = vmatpush1.msra.mxu0 0.0
  %958 = vmatprep.subr.mxu0 0.0
  %959 = vmatpush1.msra.mxu0 0.0
  %960 = vmatprep.subr.mxu0 0.0
  %961 = vmatpush1.msra.mxu0 0.0
  %962 = vmatprep.subr.mxu0 0.0
  %963 = vmatpush1.msra.mxu0 0.0
  %964 = vmatprep.mubr.f32.mxu0 0.0
  %965 = vmatmul.mubr.f32.gmra.mrb[0].mxu0 %v895
  %v966 = vpop.f32.mrb[0].mxu0
  %v967 = vadd.f32 %v893, %v966
  %v968 = vpop.f32.mrb[0].mxu0
  %969 = vmatprep.mubr.f32.mxu0 0.0
  %970 = vmatmul.mubr.f32.gmra.mrb[0].mxu0 %v898
  %v971 = vpop.f32.mrb[0].mxu0
  %v972 = vadd.f32 %v893, %v971
  %v973 = vpop.f32.mrb[0].mxu0
  %974 = vdwg.mxu0
  %v975 = vmax.f32 %v967, 0.0
  %v976 = vmax.f32 %v972, 0.0
  %v977 = vlaneseq
  %v978 = vshrl.u32 %v977, 7
  %v979 = vsub.s32 0, %v978
  %v980 = vrot.slane %v29, %v979
  %v982 = vsel %vm333, %v888, 0
  %v985 = vsel %vm333, %v889, 0
  %987 = vmatprep.subr.mxu0 0.0
  %988 = vmatpush1.msra.mxu0 %v710
  %989 = vmatprep.subr.mxu0 0.0
  %990 = vmatpush1.msra.mxu0 %v715
  %991 = vmatprep.subr.mxu0 0.0
  %992 = vmatpush1.msra.mxu0 0.0
  %993 = vmatprep.subr.mxu0 0.0
  %994 = vmatpush1.msra.mxu0 0.0
  %995 = vmatprep.subr.mxu0 0.0
  %996 = vmatpush1.msra.mxu0 0.0
  %997 = vmatprep.subr.mxu0 0.0
  %998 = vmatpush1.msra.mxu0 0.0
  %999 = vmatprep.subr.mxu0 0.0
  %1000 = vmatpush1.msra.mxu0 0.0
  %1001 = vmatprep.subr.mxu0 0.0
  %1002 = vmatpush1.msra.mxu0 0.0
  %1003 = vmatprep.subr.mxu0 0.0
  %1004 = vmatpush1.msra.mxu0 0.0
  %1005 = vmatprep.subr.mxu0 0.0
  %1006 = vmatpush1.msra.mxu0 0.0
  %1007 = vmatprep.subr.mxu0 0.0
  %1008 = vmatpush1.msra.mxu0 0.0
  %1009 = vmatprep.subr.mxu0 0.0
  %1010 = vmatpush1.msra.mxu0 0.0
  %1011 = vmatprep.subr.mxu0 0.0
  %1012 = vmatpush1.msra.mxu0 0.0
  %1013 = vmatprep.subr.mxu0 0.0
  %1014 = vmatpush1.msra.mxu0 0.0
  %1015 = vmatprep.subr.mxu0 0.0
  %1016 = vmatpush1.msra.mxu0 0.0
  %1017 = vmatprep.subr.mxu0 0.0
  %1018 = vmatpush1.msra.mxu0 0.0
  %1019 = vmatprep.subr.mxu0 0.0
  %1020 = vmatpush1.msra.mxu0 0.0
  %1021 = vmatprep.subr.mxu0 0.0
  %1022 = vmatpush1.msra.mxu0 0.0
  %1023 = vmatprep.subr.mxu0 0.0
  %1024 = vmatpush1.msra.mxu0 0.0
  %1025 = vmatprep.subr.mxu0 0.0
  %1026 = vmatpush1.msra.mxu0 0.0
  %1027 = vmatprep.subr.mxu0 0.0
  %1028 = vmatpush1.msra.mxu0 0.0
  %1029 = vmatprep.subr.mxu0 0.0
  %1030 = vmatpush1.msra.mxu0 0.0
  %1031 = vmatprep.subr.mxu0 0.0
  %1032 = vmatpush1.msra.mxu0 0.0
  %1033 = vmatprep.subr.mxu0 0.0
  %1034 = vmatpush1.msra.mxu0 0.0
  %1035 = vmatprep.subr.mxu0 0.0
  %1036 = vmatpush1.msra.mxu0 0.0
  %1037 = vmatprep.subr.mxu0 0.0
  %1038 = vmatpush1.msra.mxu0 0.0
  %1039 = vmatprep.subr.mxu0 0.0
  %1040 = vmatpush1.msra.mxu0 0.0
  %1041 = vmatprep.subr.mxu0 0.0
  %1042 = vmatpush1.msra.mxu0 0.0
  %1043 = vmatprep.subr.mxu0 0.0
  %1044 = vmatpush1.msra.mxu0 0.0
  %1045 = vmatprep.subr.mxu0 0.0
  %1046 = vmatpush1.msra.mxu0 0.0
  %1047 = vmatprep.subr.mxu0 0.0
  %1048 = vmatpush1.msra.mxu0 0.0
  %1049 = vmatprep.subr.mxu0 0.0
  %1050 = vmatpush1.msra.mxu0 0.0
  %1051 = vmatprep.mubr.f32.mxu0 0.0
  %1052 = vmatmul.mubr.f32.gmra.mrb[0].mxu0 %v982
  %v1053 = vpop.f32.mrb[0].mxu0
  %v1054 = vadd.f32 %v980, %v1053
  %v1055 = vpop.f32.mrb[0].mxu0
  %1056 = vmatprep.mubr.f32.mxu0 0.0
  %1057 = vmatmul.mubr.f32.gmra.mrb[0].mxu0 %v985
  %v1058 = vpop.f32.mrb[0].mxu0
  %v1059 = vadd.f32 %v980, %v1058
  %v1060 = vpop.f32.mrb[0].mxu0
  %1061 = vdwg.mxu0
  %v1062 = vmax.f32 %v1054, 0.0
  %v1063 = vmax.f32 %v1059, 0.0
  %v1065 = vsel %vm333, %v48, 0
  %1067 = vmatprep.subr.mxu0 0.0
  %1068 = vmatpush1.msra.mxu0 %v975
  %1069 = vmatprep.subr.mxu0 0.0
  %1070 = vmatpush1.msra.mxu0 %v976
  %1071 = vmatprep.subr.mxu0 0.0
  %1072 = vmatpush1.msra.mxu0 0.0
  %1073 = vmatprep.subr.mxu0 0.0
  %1074 = vmatpush1.msra.mxu0 0.0
  %1075 = vmatprep.subr.mxu0 0.0
  %1076 = vmatpush1.msra.mxu0 0.0
  %1077 = vmatprep.subr.mxu0 0.0
  %1078 = vmatpush1.msra.mxu0 0.0
  %1079 = vmatprep.subr.mxu0 0.0
  %1080 = vmatpush1.msra.mxu0 0.0
  %1081 = vmatprep.subr.mxu0 0.0
  %1082 = vmatpush1.msra.mxu0 0.0
  %1083 = vmatprep.subr.mxu0 0.0
  %1084 = vmatpush1.msra.mxu0 0.0
  %1085 = vmatprep.subr.mxu0 0.0
  %1086 = vmatpush1.msra.mxu0 0.0
  %1087 = vmatprep.subr.mxu0 0.0
  %1088 = vmatpush1.msra.mxu0 0.0
  %1089 = vmatprep.subr.mxu0 0.0
  %1090 = vmatpush1.msra.mxu0 0.0
  %1091 = vmatprep.subr.mxu0 0.0
  %1092 = vmatpush1.msra.mxu0 0.0
  %1093 = vmatprep.subr.mxu0 0.0
  %1094 = vmatpush1.msra.mxu0 0.0
  %1095 = vmatprep.subr.mxu0 0.0
  %1096 = vmatpush1.msra.mxu0 0.0
  %1097 = vmatprep.subr.mxu0 0.0
  %1098 = vmatpush1.msra.mxu0 0.0
  %1099 = vmatprep.subr.mxu0 0.0
  %1100 = vmatpush1.msra.mxu0 0.0
  %1101 = vmatprep.subr.mxu0 0.0
  %1102 = vmatpush1.msra.mxu0 0.0
  %1103 = vmatprep.subr.mxu0 0.0
  %1104 = vmatpush1.msra.mxu0 0.0
  %1105 = vmatprep.subr.mxu0 0.0
  %1106 = vmatpush1.msra.mxu0 0.0
  %1107 = vmatprep.subr.mxu0 0.0
  %1108 = vmatpush1.msra.mxu0 0.0
  %1109 = vmatprep.subr.mxu0 0.0
  %1110 = vmatpush1.msra.mxu0 0.0
  %1111 = vmatprep.subr.mxu0 0.0
  %1112 = vmatpush1.msra.mxu0 0.0
  %1113 = vmatprep.subr.mxu0 0.0
  %1114 = vmatpush1.msra.mxu0 0.0
  %1115 = vmatprep.subr.mxu0 0.0
  %1116 = vmatpush1.msra.mxu0 0.0
  %1117 = vmatprep.subr.mxu0 0.0
  %1118 = vmatpush1.msra.mxu0 0.0
  %1119 = vmatprep.subr.mxu0 0.0
  %1120 = vmatpush1.msra.mxu0 0.0
  %1121 = vmatprep.subr.mxu0 0.0
  %1122 = vmatpush1.msra.mxu0 0.0
  %1123 = vmatprep.subr.mxu0 0.0
  %1124 = vmatpush1.msra.mxu0 0.0
  %1125 = vmatprep.subr.mxu0 0.0
  %1126 = vmatpush1.msra.mxu0 0.0
  %1127 = vmatprep.subr.mxu0 0.0
  %1128 = vmatpush1.msra.mxu0 0.0
  %1129 = vmatprep.subr.mxu0 0.0
  %1130 = vmatpush1.msra.mxu0 0.0
  %1131 = vmatprep.mubr.f32.mxu0 0.0
  %1132 = vmatmul.mubr.f32.gmra.mrb[0].mxu0 %v1065
  %v1133 = vpop.f32.mrb[0].mxu0
  %v1134 = vadd.f32 0.0, %v1133
  %v1135 = vpop.f32.mrb[0].mxu0
  %1136 = vdwg.mxu0
  %1137 = vmatprep.subr.mxu0 0.0
  %1138 = vmatpush1.msra.mxu0 %v1062
  %1139 = vmatprep.subr.mxu0 0.0
  %1140 = vmatpush1.msra.mxu0 %v1063
  %1141 = vmatprep.subr.mxu0 0.0
  %1142 = vmatpush1.msra.mxu0 0.0
  %1143 = vmatprep.subr.mxu0 0.0
  %1144 = vmatpush1.msra.mxu0 0.0
  %1145 = vmatprep.subr.mxu0 0.0
  %1146 = vmatpush1.msra.mxu0 0.0
  %1147 = vmatprep.subr.mxu0 0.0
  %1148 = vmatpush1.msra.mxu0 0.0
  %1149 = vmatprep.subr.mxu0 0.0
  %1150 = vmatpush1.msra.mxu0 0.0
  %1151 = vmatprep.subr.mxu0 0.0
  %1152 = vmatpush1.msra.mxu0 0.0
  %1153 = vmatprep.subr.mxu0 0.0
  %1154 = vmatpush1.msra.mxu0 0.0
  %1155 = vmatprep.subr.mxu0 0.0
  %1156 = vmatpush1.msra.mxu0 0.0
  %1157 = vmatprep.subr.mxu0 0.0
  %1158 = vmatpush1.msra.mxu0 0.0
  %1159 = vmatprep.subr.mxu0 0.0
  %1160 = vmatpush1.msra.mxu0 0.0
  %1161 = vmatprep.subr.mxu0 0.0
  %1162 = vmatpush1.msra.mxu0 0.0
  %1163 = vmatprep.subr.mxu0 0.0
  %1164 = vmatpush1.msra.mxu0 0.0
  %1165 = vmatprep.subr.mxu0 0.0
  %1166 = vmatpush1.msra.mxu0 0.0
  %1167 = vmatprep.subr.mxu0 0.0
  %1168 = vmatpush1.msra.mxu0 0.0
  %1169 = vmatprep.subr.mxu0 0.0
  %1170 = vmatpush1.msra.mxu0 0.0
  %1171 = vmatprep.subr.mxu0 0.0
  %1172 = vmatpush1.msra.mxu0 0.0
  %1173 = vmatprep.subr.mxu0 0.0
  %1174 = vmatpush1.msra.mxu0 0.0
  %1175 = vmatprep.subr.mxu0 0.0
  %1176 = vmatpush1.msra.mxu0 0.0
  %1177 = vmatprep.subr.mxu0 0.0
  %1178 = vmatpush1.msra.mxu0 0.0
  %1179 = vmatprep.subr.mxu0 0.0
  %1180 = vmatpush1.msra.mxu0 0.0
  %1181 = vmatprep.subr.mxu0 0.0
  %1182 = vmatpush1.msra.mxu0 0.0
  %1183 = vmatprep.subr.mxu0 0.0
  %1184 = vmatpush1.msra.mxu0 0.0
  %1185 = vmatprep.subr.mxu0 0.0
  %1186 = vmatpush1.msra.mxu0 0.0
  %1187 = vmatprep.subr.mxu0 0.0
  %1188 = vmatpush1.msra.mxu0 0.0
  %1189 = vmatprep.subr.mxu0 0.0
  %1190 = vmatpush1.msra.mxu0 0.0
  %1191 = vmatprep.subr.mxu0 0.0
  %1192 = vmatpush1.msra.mxu0 0.0
  %1193 = vmatprep.subr.mxu0 0.0
  %1194 = vmatpush1.msra.mxu0 0.0
  %1195 = vmatprep.subr.mxu0 0.0
  %1196 = vmatpush1.msra.mxu0 0.0
  %1197 = vmatprep.subr.mxu0 0.0
  %1198 = vmatpush1.msra.mxu0 0.0
  %1199 = vmatprep.subr.mxu0 0.0
  %1200 = vmatpush1.msra.mxu0 0.0
  %1201 = vmatprep.mubr.f32.mxu0 0.0
  %1202 = vmatmul.mubr.f32.gmra.mrb[0].mxu0 %v1065
  %v1203 = vpop.f32.mrb[0].mxu0
  %v1204 = vadd.f32 0.0, %v1203
  %v1205 = vpop.f32.mrb[0].mxu0
  %1206 = vdwg.mxu0
  %1208 = vrot.lane.b32.xlu0 %v1204, 16
  %v1209 = vpop.permute.xlu0 %1208
  %v1211 = vsel %vm333, %v1134, %v1209
  %v1212 = vlaneseq
  %v1213 = vshrl.u32 %v1212, 7
  %v1214 = vsub.s32 0, %v1213
  %v1215 = vrot.slane %v34, %v1214
  %vm1216 = vcmask 261120
  %v1218 = vsel %vm1216, %v1211, 0
  %1220 = vmatprep.subr.mxu0 0.0
  %1221 = vmatpush1.msra.mxu0 %v30
  %1222 = vmatprep.subr.mxu0 0.0
  %1223 = vmatpush1.msra.mxu0 %v31
  %1224 = vmatprep.subr.mxu0 0.0
  %1225 = vmatpush1.msra.mxu0 %v32
  %1226 = vmatprep.subr.mxu0 0.0
  %1227 = vmatpush1.msra.mxu0 %v33
  %1228 = vmatprep.subr.mxu0 0.0
  %1229 = vmatpush1.msra.mxu0 0.0
  %1230 = vmatprep.subr.mxu0 0.0
  %1231 = vmatpush1.msra.mxu0 0.0
  %1232 = vmatprep.subr.mxu0 0.0
  %1233 = vmatpush1.msra.mxu0 0.0
  %1234 = vmatprep.subr.mxu0 0.0
  %1235 = vmatpush1.msra.mxu0 0.0
  %1236 = vmatprep.subr.mxu0 0.0
  %1237 = vmatpush1.msra.mxu0 0.0
  %1238 = vmatprep.subr.mxu0 0.0
  %1239 = vmatpush1.msra.mxu0 0.0
  %1240 = vmatprep.subr.mxu0 0.0
  %1241 = vmatpush1.msra.mxu0 0.0
  %1242 = vmatprep.subr.mxu0 0.0
  %1243 = vmatpush1.msra.mxu0 0.0
  %1244 = vmatprep.subr.mxu0 0.0
  %1245 = vmatpush1.msra.mxu0 0.0
  %1246 = vmatprep.subr.mxu0 0.0
  %1247 = vmatpush1.msra.mxu0 0.0
  %1248 = vmatprep.subr.mxu0 0.0
  %1249 = vmatpush1.msra.mxu0 0.0
  %1250 = vmatprep.subr.mxu0 0.0
  %1251 = vmatpush1.msra.mxu0 0.0
  %1252 = vmatprep.subr.mxu0 0.0
  %1253 = vmatpush1.msra.mxu0 0.0
  %1254 = vmatprep.subr.mxu0 0.0
  %1255 = vmatpush1.msra.mxu0 0.0
  %1256 = vmatprep.subr.mxu0 0.0
  %1257 = vmatpush1.msra.mxu0 0.0
  %1258 = vmatprep.subr.mxu0 0.0
  %1259 = vmatpush1.msra.mxu0 0.0
  %1260 = vmatprep.subr.mxu0 0.0
  %1261 = vmatpush1.msra.mxu0 0.0
  %1262 = vmatprep.subr.mxu0 0.0
  %1263 = vmatpush1.msra.mxu0 0.0
  %1264 = vmatprep.subr.mxu0 0.0
  %1265 = vmatpush1.msra.mxu0 0.0
  %1266 = vmatprep.subr.mxu0 0.0
  %1267 = vmatpush1.msra.mxu0 0.0
  %1268 = vmatprep.subr.mxu0 0.0
  %1269 = vmatpush1.msra.mxu0 0.0
  %1270 = vmatprep.subr.mxu0 0.0
  %1271 = vmatpush1.msra.mxu0 0.0
  %1272 = vmatprep.subr.mxu0 0.0
  %1273 = vmatpush1.msra.mxu0 0.0
  %1274 = vmatprep.subr.mxu0 0.0
  %1275 = vmatpush1.msra.mxu0 0.0
  %1276 = vmatprep.subr.mxu0 0.0
  %1277 = vmatpush1.msra.mxu0 0.0
  %1278 = vmatprep.subr.mxu0 0.0
  %1279 = vmatpush1.msra.mxu0 0.0
  %1280 = vmatprep.subr.mxu0 0.0
  %1281 = vmatpush1.msra.mxu0 0.0
  %1282 = vmatprep.subr.mxu0 0.0
  %1283 = vmatpush1.msra.mxu0 0.0
  %1284 = vmatprep.mubr.f32.mxu0 0.0
  %1285 = vmatmul.mubr.f32.gmra.mrb[0].mxu0 %v1218
  %v1286 = vpop.f32.mrb[0].mxu0
  %v1287 = vadd.f32 %v1215, %v1286
  %v1288 = vpop.f32.mrb[0].mxu0
  %1289 = vdwg.mxu0
  %v1290 = vmax.f32 %v1287, 0.0
  %v1291 = vlaneseq
  %v1292 = vshrl.u32 %v1291, 7
  %v1293 = vsub.s32 0, %v1292
  %v1294 = vrot.slane %v37, %v1293
  %v1296 = vsel %vm333, %v1290, 0
  %1298 = vmatprep.subr.mxu0 0.0
  %1299 = vmatpush1.msra.mxu0 %v35
  %1300 = vmatprep.subr.mxu0 0.0
  %1301 = vmatpush1.msra.mxu0 %v36
  %1302 = vmatprep.subr.mxu0 0.0
  %1303 = vmatpush1.msra.mxu0 0.0
  %1304 = vmatprep.subr.mxu0 0.0
  %1305 = vmatpush1.msra.mxu0 0.0
  %1306 = vmatprep.subr.mxu0 0.0
  %1307 = vmatpush1.msra.mxu0 0.0
  %1308 = vmatprep.subr.mxu0 0.0
  %1309 = vmatpush1.msra.mxu0 0.0
  %1310 = vmatprep.subr.mxu0 0.0
  %1311 = vmatpush1.msra.mxu0 0.0
  %1312 = vmatprep.subr.mxu0 0.0
  %1313 = vmatpush1.msra.mxu0 0.0
  %1314 = vmatprep.subr.mxu0 0.0
  %1315 = vmatpush1.msra.mxu0 0.0
  %1316 = vmatprep.subr.mxu0 0.0
  %1317 = vmatpush1.msra.mxu0 0.0
  %1318 = vmatprep.subr.mxu0 0.0
  %1319 = vmatpush1.msra.mxu0 0.0
  %1320 = vmatprep.subr.mxu0 0.0
  %1321 = vmatpush1.msra.mxu0 0.0
  %1322 = vmatprep.subr.mxu0 0.0
  %1323 = vmatpush1.msra.mxu0 0.0
  %1324 = vmatprep.subr.mxu0 0.0
  %1325 = vmatpush1.msra.mxu0 0.0
  %1326 = vmatprep.subr.mxu0 0.0
  %1327 = vmatpush1.msra.mxu0 0.0
  %1328 = vmatprep.subr.mxu0 0.0
  %1329 = vmatpush1.msra.mxu0 0.0
  %1330 = vmatprep.subr.mxu0 0.0
  %1331 = vmatpush1.msra.mxu0 0.0
  %1332 = vmatprep.subr.mxu0 0.0
  %1333 = vmatpush1.msra.mxu0 0.0
  %1334 = vmatprep.subr.mxu0 0.0
  %1335 = vmatpush1.msra.mxu0 0.0
  %1336 = vmatprep.subr.mxu0 0.0
  %1337 = vmatpush1.msra.mxu0 0.0
  %1338 = vmatprep.subr.mxu0 0.0
  %1339 = vmatpush1.msra.mxu0 0.0
  %1340 = vmatprep.subr.mxu0 0.0
  %1341 = vmatpush1.msra.mxu0 0.0
  %1342 = vmatprep.subr.mxu0 0.0
  %1343 = vmatpush1.msra.mxu0 0.0
  %1344 = vmatprep.subr.mxu0 0.0
  %1345 = vmatpush1.msra.mxu0 0.0
  %1346 = vmatprep.subr.mxu0 0.0
  %1347 = vmatpush1.msra.mxu0 0.0
  %1348 = vmatprep.subr.mxu0 0.0
  %1349 = vmatpush1.msra.mxu0 0.0
  %1350 = vmatprep.subr.mxu0 0.0
  %1351 = vmatpush1.msra.mxu0 0.0
  %1352 = vmatprep.subr.mxu0 0.0
  %1353 = vmatpush1.msra.mxu0 0.0
  %1354 = vmatprep.subr.mxu0 0.0
  %1355 = vmatpush1.msra.mxu0 0.0
  %1356 = vmatprep.subr.mxu0 0.0
  %1357 = vmatpush1.msra.mxu0 0.0
  %1358 = vmatprep.subr.mxu0 0.0
  %1359 = vmatpush1.msra.mxu0 0.0
  %1360 = vmatprep.subr.mxu0 0.0
  %1361 = vmatpush1.msra.mxu0 0.0
  %1362 = vmatprep.mubr.f32.mxu0 0.0
  %1363 = vmatmul.mubr.f32.gmra.mrb[0].mxu0 %v1296
  %v1364 = vpop.f32.mrb[0].mxu0
  %v1365 = vadd.f32 %v1294, %v1364
  %v1366 = vpop.f32.mrb[0].mxu0
  %1367 = vdwg.mxu0
  %v1368 = vlaneseq
  %v1369 = vshrl.u32 %v1368, 7
  %v1370 = vsub.s32 0, %v1369
  %v1371 = vrot.slane %v40, %v1370
  %v1373 = vsel %vm333, %v1134, 0
  %v1375 = vsel %vm333, %v1204, 0
  %1377 = vmatprep.subr.mxu0 0.0
  %1378 = vmatpush1.msra.mxu0 %v38
  %1379 = vmatprep.subr.mxu0 0.0
  %1380 = vmatpush1.msra.mxu0 %v39
  %1381 = vmatprep.subr.mxu0 0.0
  %1382 = vmatpush1.msra.mxu0 0.0
  %1383 = vmatprep.subr.mxu0 0.0
  %1384 = vmatpush1.msra.mxu0 0.0
  %1385 = vmatprep.subr.mxu0 0.0
  %1386 = vmatpush1.msra.mxu0 0.0
  %1387 = vmatprep.subr.mxu0 0.0
  %1388 = vmatpush1.msra.mxu0 0.0
  %1389 = vmatprep.subr.mxu0 0.0
  %1390 = vmatpush1.msra.mxu0 0.0
  %1391 = vmatprep.subr.mxu0 0.0
  %1392 = vmatpush1.msra.mxu0 0.0
  %1393 = vmatprep.subr.mxu0 0.0
  %1394 = vmatpush1.msra.mxu0 0.0
  %1395 = vmatprep.subr.mxu0 0.0
  %1396 = vmatpush1.msra.mxu0 0.0
  %1397 = vmatprep.subr.mxu0 0.0
  %1398 = vmatpush1.msra.mxu0 0.0
  %1399 = vmatprep.subr.mxu0 0.0
  %1400 = vmatpush1.msra.mxu0 0.0
  %1401 = vmatprep.subr.mxu0 0.0
  %1402 = vmatpush1.msra.mxu0 0.0
  %1403 = vmatprep.subr.mxu0 0.0
  %1404 = vmatpush1.msra.mxu0 0.0
  %1405 = vmatprep.subr.mxu0 0.0
  %1406 = vmatpush1.msra.mxu0 0.0
  %1407 = vmatprep.subr.mxu0 0.0
  %1408 = vmatpush1.msra.mxu0 0.0
  %1409 = vmatprep.subr.mxu0 0.0
  %1410 = vmatpush1.msra.mxu0 0.0
  %1411 = vmatprep.subr.mxu0 0.0
  %1412 = vmatpush1.msra.mxu0 0.0
  %1413 = vmatprep.subr.mxu0 0.0
  %1414 = vmatpush1.msra.mxu0 0.0
  %1415 = vmatprep.subr.mxu0 0.0
  %1416 = vmatpush1.msra.mxu0 0.0
  %1417 = vmatprep.subr.mxu0 0.0
  %1418 = vmatpush1.msra.mxu0 0.0
  %1419 = vmatprep.subr.mxu0 0.0
  %1420 = vmatpush1.msra.mxu0 0.0
  %1421 = vmatprep.subr.mxu0 0.0
  %1422 = vmatpush1.msra.mxu0 0.0
  %1423 = vmatprep.subr.mxu0 0.0
  %1424 = vmatpush1.msra.mxu0 0.0
  %1425 = vmatprep.subr.mxu0 0.0
  %1426 = vmatpush1.msra.mxu0 0.0
  %1427 = vmatprep.subr.mxu0 0.0
  %1428 = vmatpush1.msra.mxu0 0.0
  %1429 = vmatprep.subr.mxu0 0.0
  %1430 = vmatpush1.msra.mxu0 0.0
  %1431 = vmatprep.subr.mxu0 0.0
  %1432 = vmatpush1.msra.mxu0 0.0
  %1433 = vmatprep.subr.mxu0 0.0
  %1434 = vmatpush1.msra.mxu0 0.0
  %1435 = vmatprep.subr.mxu0 0.0
  %1436 = vmatpush1.msra.mxu0 0.0
  %1437 = vmatprep.subr.mxu0 0.0
  %1438 = vmatpush1.msra.mxu0 0.0
  %1439 = vmatprep.subr.mxu0 0.0
  %1440 = vmatpush1.msra.mxu0 0.0
  %1441 = vmatprep.mubr.f32.mxu0 0.0
  %1442 = vmatmul.mubr.f32.gmra.mrb[0].mxu0 %v1373
  %v1443 = vpop.f32.mrb[0].mxu0
  %v1444 = vadd.f32 %v1371, %v1443
  %v1445 = vpop.f32.mrb[0].mxu0
  %1446 = vmatprep.mubr.f32.mxu0 0.0
  %1447 = vmatmul.mubr.f32.gmra.mrb[0].mxu0 %v1375
  %v1448 = vpop.f32.mrb[0].mxu0
  %v1449 = vadd.f32 %v1371, %v1448
  %v1450 = vpop.f32.mrb[0].mxu0
  %1451 = vdwg.mxu0
  %v1452 = vmax.f32 %v1444, 0.0
  %v1453 = vmax.f32 %v1449, 0.0
  %v1454 = vlaneseq
  %v1455 = vshrl.u32 %v1454, 7
  %v1456 = vsub.s32 0, %v1455
  %v1457 = vrot.slane %v43, %v1456
  %v1459 = vsel %vm333, %v1452, 0
  %v1462 = vsel %vm333, %v1453, 0
  %1464 = vmatprep.subr.mxu0 0.0
  %1465 = vmatpush1.msra.mxu0 %v41
  %1466 = vmatprep.subr.mxu0 0.0
  %1467 = vmatpush1.msra.mxu0 %v42
  %1468 = vmatprep.subr.mxu0 0.0
  %1469 = vmatpush1.msra.mxu0 0.0
  %1470 = vmatprep.subr.mxu0 0.0
  %1471 = vmatpush1.msra.mxu0 0.0
  %1472 = vmatprep.subr.mxu0 0.0
  %1473 = vmatpush1.msra.mxu0 0.0
  %1474 = vmatprep.subr.mxu0 0.0
  %1475 = vmatpush1.msra.mxu0 0.0
  %1476 = vmatprep.subr.mxu0 0.0
  %1477 = vmatpush1.msra.mxu0 0.0
  %1478 = vmatprep.subr.mxu0 0.0
  %1479 = vmatpush1.msra.mxu0 0.0
  %1480 = vmatprep.subr.mxu0 0.0
  %1481 = vmatpush1.msra.mxu0 0.0
  %1482 = vmatprep.subr.mxu0 0.0
  %1483 = vmatpush1.msra.mxu0 0.0
  %1484 = vmatprep.subr.mxu0 0.0
  %1485 = vmatpush1.msra.mxu0 0.0
  %1486 = vmatprep.subr.mxu0 0.0
  %1487 = vmatpush1.msra.mxu0 0.0
  %1488 = vmatprep.subr.mxu0 0.0
  %1489 = vmatpush1.msra.mxu0 0.0
  %1490 = vmatprep.subr.mxu0 0.0
  %1491 = vmatpush1.msra.mxu0 0.0
  %1492 = vmatprep.subr.mxu0 0.0
  %1493 = vmatpush1.msra.mxu0 0.0
  %1494 = vmatprep.subr.mxu0 0.0
  %1495 = vmatpush1.msra.mxu0 0.0
  %1496 = vmatprep.subr.mxu0 0.0
  %1497 = vmatpush1.msra.mxu0 0.0
  %1498 = vmatprep.subr.mxu0 0.0
  %1499 = vmatpush1.msra.mxu0 0.0
  %1500 = vmatprep.subr.mxu0 0.0
  %1501 = vmatpush1.msra.mxu0 0.0
  %1502 = vmatprep.subr.mxu0 0.0
  %1503 = vmatpush1.msra.mxu0 0.0
  %1504 = vmatprep.subr.mxu0 0.0
  %1505 = vmatpush1.msra.mxu0 0.0
  %1506 = vmatprep.subr.mxu0 0.0
  %1507 = vmatpush1.msra.mxu0 0.0
  %1508 = vmatprep.subr.mxu0 0.0
  %1509 = vmatpush1.msra.mxu0 0.0
  %1510 = vmatprep.subr.mxu0 0.0
  %1511 = vmatpush1.msra.mxu0 0.0
  %1512 = vmatprep.subr.mxu0 0.0
  %1513 = vmatpush1.msra.mxu0 0.0
  %1514 = vmatprep.subr.mxu0 0.0
  %1515 = vmatpush1.msra.mxu0 0.0
  %1516 = vmatprep.subr.mxu0 0.0
  %1517 = vmatpush1.msra.mxu0 0.0
  %1518 = vmatprep.subr.mxu0 0.0
  %1519 = vmatpush1.msra.mxu0 0.0
  %1520 = vmatprep.subr.mxu0 0.0
  %1521 = vmatpush1.msra.mxu0 0.0
  %1522 = vmatprep.subr.mxu0 0.0
  %1523 = vmatpush1.msra.mxu0 0.0
  %1524 = vmatprep.subr.mxu0 0.0
  %1525 = vmatpush1.msra.mxu0 0.0
  %1526 = vmatprep.subr.mxu0 0.0
  %1527 = vmatpush1.msra.mxu0 0.0
  %1528 = vmatprep.mubr.f32.mxu0 0.0
  %1529 = vmatmul.mubr.f32.gmra.mrb[0].mxu0 %v1459
  %v1530 = vpop.f32.mrb[0].mxu0
  %v1531 = vadd.f32 %v1457, %v1530
  %v1532 = vpop.f32.mrb[0].mxu0
  %1533 = vmatprep.mubr.f32.mxu0 0.0
  %1534 = vmatmul.mubr.f32.gmra.mrb[0].mxu0 %v1462
  %v1535 = vpop.f32.mrb[0].mxu0
  %v1536 = vadd.f32 %v1457, %v1535
  %v1537 = vpop.f32.mrb[0].mxu0
  %1538 = vdwg.mxu0
  %1540 = vset.pattern.permute.xlu0 0
  %1541 = vperm.xlu0 %1540, %v49
  %v1542 = vpop.permute.xlu0 %1541
  %v1544 = vmul.f32 %v1542, %v1365
  %1545 = vset.pattern.permute.xlu0 1
  %1546 = vperm.xlu0 %1545, %v49
  %v1547 = vpop.permute.xlu0 %1546
  %v1549 = vmul.f32 %v1547, %v1531
  %v1550 = vadd.f32 %v1544, %v1549
  %1551 = vset.pattern.permute.xlu0 2
  %1552 = vperm.xlu0 %1551, %v49
  %v1553 = vpop.permute.xlu0 %1552
  %v1555 = vmul.f32 %v1553, %v1536
  %v1556 = vadd.f32 %v1550, %v1555
  %vm1557 = vcmask 15360
  %1558 = vst.msk [vmem:[%s5] sm:$0xff] %vm1557, %v1556
  // Predicated region
  $region22: #{forward.1} parent=0 // pred_check
    _
  $region23: #{forward.1} parent=0 // pred_check_branch
    %1560 = sbr.rel (0) target = $region25
  $region24: #{forward.1} parent=0 // pred_region
    _
  $region25: #{forward.1} parent=0 // pred_fallthru
    _
  // Predicated region
  $region26: #{forward.1} parent=0 // pred_check
    _
  $region27: #{forward.1} parent=0 // pred_check_branch
    %1562 = sbr.rel (0) target = $region29
  $region28: #{forward.1} parent=0 // pred_region
    _
  $region29: #{forward.1} parent=0 // pred_fallthru
    _

</llo_original>
